<compile_context>
chip_gen: v5e
topology: v5e:2x2
jax: 0.10.0
libtpu: 0.0.40
codegen_flags: <defaults>
</compile_context>

<pallas_src>
import math
import jax
import jax.numpy as jnp
from jax import lax
from jax.experimental import pallas as pl
from jax.experimental.pallas import tpu as pltpu

# ----------------------------- config ---------------------------------------
B, S, D = 2, 8, 32          # batch, seq len, embed_dim == pred_dim
H = 4                       # n_heads
DH = D // H                 # head dim
FF = 4 * D                  # dim_feedforward = pred_dim * 4
N_LAYERS = 2
ALIBI_CONST = 8.0
NEG_INF = -1e9              # additive key-padding mask value
# NOTE: dropout is treated as identity (eval / inference mode).


def get_slopes(n_heads, alibi_const):
    # TODO(synk): original get_slopes() source unavailable; use standard ALiBi
    # geometric slopes scaled by alibi_const (deterministic).
    return [2.0 ** (-alibi_const * (h + 1) / n_heads) for h in range(n_heads)]


SLOPES = get_slopes(H, ALIBI_CONST)   # compile-time constants baked into the kernel

# --- packed small-vector layout: one 128-lane row per parameter, lane offset 0
ROW_PRE_G = 0               # pre-encoder LayerNorm gamma (D lanes)
ROW_PRE_B = 1               # pre-encoder LayerNorm beta
R_BQKV = 0                  # fused q/k/v bias (3*H*DH = 96 lanes, head-major)
R_BO = 1                    # out-proj bias (D)
R_G1 = 2                    # LN1 gamma (D)
R_BE1 = 3                   # LN1 beta
R_G2 = 4                    # LN2 gamma
R_BE2 = 5                   # LN2 beta
R_B1 = 6                    # FFN bias1 (FF = 128)
R_B2 = 7                    # FFN bias2 (D)
ROWS_PER_LAYER = 8
NROWS = 2 + N_LAYERS * ROWS_PER_LAYER   # = 18


# ----------------------------- kernel ----------------------------------------
def fused_eventagg_kernel(x_ref, times_ref, ids_ref, wqkv_ref, wo_ref, w1_ref,
                          w2_ref, vecs_ref, out_ref, ctx_ref):
    # x_ref:    (B*S, D) f32          times_ref: (B, S) f32    ids_ref: (B, S) i32
    # wqkv_ref: (N_LAYERS, D, 3*H*DH) bf16   (head-major lane layout q|k|v)
    # wo_ref:   (N_LAYERS, H*DH, D)   bf16
    # w1_ref:   (N_LAYERS, D, FF)     bf16   w2_ref: (N_LAYERS, FF, D) bf16
    # vecs_ref: (NROWS, 128) f32      packed small vectors (lane offset 0)
    # out_ref:  (B*S, D) f32          ctx_ref: (B*S, D) f32 VMEM scratch

    def vrow(r, n):
        return vecs_ref[r:r + 1, :n]                     # (1, n), static slice

    def ln(val, g, b, eps):
        mu = jnp.mean(val, axis=-1, keepdims=True)
        var = jnp.mean((val - mu) ** 2, axis=-1, keepdims=True)
        return (val - mu) * jax.lax.rsqrt(var + eps) * g + b

    scale = 1.0 / math.sqrt(DH)

    # --- pre-encoder LayerNorm (eps = 1e-12, as in the PyTorch module), f32
    x = x_ref[...]                                       # (B*S, D)
    h = ln(x, vrow(ROW_PRE_G, D), vrow(ROW_PRE_B, D), 1e-12)

    # --- per-key additive bias pieces, computed in-kernel on the VPU
    times = times_ref[...]                               # (B, S) f32
    pad_pen = jnp.where(ids_ref[...] == 0, NEG_INF, 0.0)  # (B, S) f32

    for l in range(N_LAYERS):                            # static unroll over layers
        base = 2 + l * ROWS_PER_LAYER

        # ---- fused Q/K/V projection for ALL heads (lane-dense 96-wide RHS)
        qkv = jnp.dot(h.astype(jnp.bfloat16), wqkv_ref[l],
                      preferred_element_type=jnp.float32)        # (B*S, 3*H*DH)
        qkv = qkv + vrow(base + R_BQKV, 3 * H * DH)

        # ---- per-(batch, head) attention; contexts written into lane slices
        for b in range(B):                               # static unroll
            rs = b * S
            t_b = times[b:b + 1, :]                      # (1, S)
            pad_b = pad_pen[b:b + 1, :]                  # (1, S)
            for hd in range(H):                          # static unroll
                q = qkv[rs:rs + S, hd * DH:(hd + 1) * DH]              # (S, DH)
                k = qkv[rs:rs + S, (H + hd) * DH:(H + hd + 1) * DH]
                v = qkv[rs:rs + S, (2 * H + hd) * DH:(2 * H + hd + 1) * DH]

                # q @ k^T without materializing a transpose
                s = lax.dot_general(q, k, (((1,), (1,)), ((), ())),
                                    preferred_element_type=jnp.float32) * scale
                # additive bias: slope*times[key] + key-padding (broadcast over queries)
                s = s + (SLOPES[hd] * t_b + pad_b)
                s = s - jnp.max(s, axis=-1, keepdims=True)
                p = jnp.exp(s)
                p = p * pl.reciprocal(jnp.sum(p, axis=-1, keepdims=True), approx=True)

                ctx_h = jnp.dot(p, v, preferred_element_type=jnp.float32)  # (S, DH)
                ctx_ref[rs:rs + S, hd * DH:(hd + 1) * DH] = ctx_h

        # ---- fused out-projection: one (B*S, D) @ (D, D) matmul
        attn = jnp.dot(ctx_ref[...].astype(jnp.bfloat16), wo_ref[l],
                       preferred_element_type=jnp.float32)
        attn = attn + vrow(base + R_BO, D)

        # ---- residual + LayerNorm1 (post-norm, eps = 1e-5)
        x1 = ln(h + attn, vrow(base + R_G1, D), vrow(base + R_BE1, D), 1e-5)

        # ---- feed-forward: linear -> relu -> linear (bf16 operands, f32 accum)
        f = jnp.dot(x1.astype(jnp.bfloat16), w1_ref[l],
                    preferred_element_type=jnp.float32) + vrow(base + R_B1, FF)
        f = jnp.maximum(f, 0.0)
        f = jnp.dot(f.astype(jnp.bfloat16), w2_ref[l],
                    preferred_element_type=jnp.float32) + vrow(base + R_B2, D)

        # ---- residual + LayerNorm2 (eps = 1e-5)
        h = ln(x1 + f, vrow(base + R_G2, D), vrow(base + R_BE2, D), 1e-5)

    out_ref[...] = h


# ----------------------------- wrapper ---------------------------------------
def event_aggregator_forward(x, input_ids, times, params):
    # Fold batch into sublanes: (B, S, D) -> (B*S, D); free row-major reshape.
    x_flat = x.reshape(B * S, D).astype(jnp.float32)

    out_flat = pl.pallas_call(
        fused_eventagg_kernel,
        out_shape=jax.ShapeDtypeStruct((B * S, D), jnp.float32),
        scratch_shapes=[pltpu.VMEM((B * S, D), jnp.float32)],   # per-head context slab
    )(x_flat,
      times.astype(jnp.float32),
      input_ids.astype(jnp.int32),
      params["wqkv"], params["wo"], params["w1"], params["w2"], params["vecs"])

    return out_flat.reshape(B, S, D)


# ----------------------------- init / main ----------------------------------
def init_params(key):
    def w(k, shape, scale=0.02):
        return (scale * jax.random.normal(k, shape, dtype=jnp.float32)).astype(jnp.bfloat16)

    keys = jax.random.split(key, 8)
    params = {
        # pre-transposed, head-major packed weights (kernel computes x @ W):
        "wqkv": w(keys[0], (N_LAYERS, D, 3 * H * DH)),   # lanes = [q_h0..q_hH | k.. | v..]
        "wo":   w(keys[1], (N_LAYERS, H * DH, D)),       # rows match ctx lane order
        "w1":   w(keys[2], (N_LAYERS, D, FF)),
        "w2":   w(keys[3], (N_LAYERS, FF, D)),
    }

    # pack all small vectors into one (NROWS, 128) f32 array, each at lane offset 0
    vecs = jnp.zeros((NROWS, 128), jnp.float32)
    vecs = vecs.at[ROW_PRE_G, :D].set(1.0 + 0.01 * jax.random.normal(keys[4], (D,)))
    vecs = vecs.at[ROW_PRE_B, :D].set(0.01 * jax.random.normal(keys[5], (D,)))
    layer_keys = jax.random.split(keys[6], N_LAYERS)
    for l in range(N_LAYERS):
        base = 2 + l * ROWS_PER_LAYER
        ks = jax.random.split(layer_keys[l], 4)
        vecs = vecs.at[base + R_BQKV, :3 * H * DH].set(
            0.01 * jax.random.normal(ks[0], (3 * H * DH,)))
        vecs = vecs.at[base + R_BO, :D].set(0.01 * jax.random.normal(ks[1], (D,)))
        vecs = vecs.at[base + R_G1, :D].set(1.0)
        vecs = vecs.at[base + R_BE1, :D].set(0.0)
        vecs = vecs.at[base + R_G2, :D].set(1.0)
        vecs = vecs.at[base + R_BE2, :D].set(0.0)
        vecs = vecs.at[base + R_B1, :FF].set(0.01 * jax.random.normal(ks[2], (FF,)))
        vecs = vecs.at[base + R_B2, :D].set(0.01 * jax.random.normal(ks[3], (D,)))
    params["vecs"] = vecs
    return params


if __name__ == "__main__":
    root = jax.random.PRNGKey(0)
    kx, kt, kp = jax.random.split(root, 3)

    x = jax.random.normal(kx, (B, S, D), dtype=jnp.float32)
    times = jax.random.uniform(kt, (B, S), dtype=jnp.float32, minval=0.0, maxval=10.0)
    # input_ids: nonzero tokens with trailing padding (no fully-padded key rows)
    input_ids = jnp.array([[5, 7, 3, 9, 2, 1, 0, 0],
                           [4, 6, 8, 1, 0, 0, 0, 0]], dtype=jnp.int32)

    params = init_params(kp)
    out = event_aggregator_forward(x, input_ids, times, params)
    out = jax.block_until_ready(out)
    assert out.shape == (B, S, D) and jnp.all(jnp.isfinite(out))
    print("KERNEL_OK")
</pallas_src>

<mosaic_0001>
module attributes {stable_mosaic.version = 11 : i64} {
  func.func @fused_eventagg_kernel(%arg0: memref<16x32xf32, #tpu.memory_space<vmem>>, %arg1: memref<2x8xf32, #tpu.memory_space<vmem>>, %arg2: memref<2x8xi32, #tpu.memory_space<vmem>>, %arg3: memref<2x32x96xbf16, #tpu.memory_space<vmem>>, %arg4: memref<2x32x32xbf16, #tpu.memory_space<vmem>>, %arg5: memref<2x32x128xbf16, #tpu.memory_space<vmem>>, %arg6: memref<2x128x32xbf16, #tpu.memory_space<vmem>>, %arg7: memref<18x128xf32, #tpu.memory_space<vmem>>, %arg8: memref<16x32xf32, #tpu.memory_space<vmem>>, %arg9: memref<16x32xf32, #tpu.memory_space<vmem>>) attributes {dimension_semantics = [], scalar_prefetch = 0 : i64, scratch_operands = 1 : i64, tpu.core_type = #tpu.core_type<tc>} {
    %c0 = arith.constant 0 : index
    %c0_0 = arith.constant 0 : index
    %0 = vector.load %arg0[%c0, %c0_0] : memref<16x32xf32, #tpu.memory_space<vmem>>, vector<16x32xf32>
    %c0_1 = arith.constant 0 : index
    %c0_2 = arith.constant 0 : index
    %1 = vector.load %arg7[%c0_1, %c0_2] : memref<18x128xf32, #tpu.memory_space<vmem>>, vector<1x32xf32>
    %c1 = arith.constant 1 : index
    %c0_3 = arith.constant 0 : index
    %2 = vector.load %arg7[%c1, %c0_3] : memref<18x128xf32, #tpu.memory_space<vmem>>, vector<1x32xf32>
    %cst = arith.constant dense<0.000000e+00> : vector<16xf32>
    %3 = vector.multi_reduction <add>, %0, %cst [1] : vector<16x32xf32> to vector<16xf32>
    %4 = vector.shape_cast %3 : vector<16xf32> to vector<16x1xf32>
    %cst_4 = arith.constant 3.200000e+01 : f32
    %5 = vector.broadcast %cst_4 : f32 to vector<16x1xf32>
    %6 = arith.divf %4, %5 : vector<16x1xf32>
    %7 = vector.broadcast %6 : vector<16x1xf32> to vector<16x32xf32>
    %8 = arith.subf %0, %7 : vector<16x32xf32>
    %9 = arith.mulf %8, %8 : vector<16x32xf32>
    %cst_5 = arith.constant dense<0.000000e+00> : vector<16xf32>
    %10 = vector.multi_reduction <add>, %9, %cst_5 [1] : vector<16x32xf32> to vector<16xf32>
    %11 = vector.shape_cast %10 : vector<16xf32> to vector<16x1xf32>
    %cst_6 = arith.constant 3.200000e+01 : f32
    %12 = vector.broadcast %cst_6 : f32 to vector<16x1xf32>
    %13 = arith.divf %11, %12 : vector<16x1xf32>
    %14 = vector.broadcast %6 : vector<16x1xf32> to vector<16x32xf32>
    %15 = arith.subf %0, %14 : vector<16x32xf32>
    %cst_7 = arith.constant 9.99999996E-13 : f32
    %16 = vector.broadcast %cst_7 : f32 to vector<16x1xf32>
    %17 = arith.addf %13, %16 : vector<16x1xf32>
    %18 = math.rsqrt %17 : vector<16x1xf32>
    %19 = vector.broadcast %18 : vector<16x1xf32> to vector<16x32xf32>
    %20 = arith.mulf %15, %19 : vector<16x32xf32>
    %21 = vector.broadcast %1 : vector<1x32xf32> to vector<16x32xf32>
    %22 = arith.mulf %20, %21 : vector<16x32xf32>
    %23 = vector.broadcast %2 : vector<1x32xf32> to vector<16x32xf32>
    %24 = arith.addf %22, %23 : vector<16x32xf32>
    %c0_8 = arith.constant 0 : index
    %c0_9 = arith.constant 0 : index
    %25 = vector.load %arg1[%c0_8, %c0_9] : memref<2x8xf32, #tpu.memory_space<vmem>>, vector<2x8xf32>
    %c0_10 = arith.constant 0 : index
    %c0_11 = arith.constant 0 : index
    %26 = vector.load %arg2[%c0_10, %c0_11] : memref<2x8xi32, #tpu.memory_space<vmem>>, vector<2x8xi32>
    %c0_i32 = arith.constant 0 : i32
    %27 = vector.broadcast %c0_i32 : i32 to vector<2x8xi32>
    %28 = arith.cmpi eq, %26, %27 : vector<2x8xi32>
    %cst_12 = arith.constant -1.000000e+09 : f32
    %cst_13 = arith.constant 0.000000e+00 : f32
    %29 = vector.broadcast %cst_12 : f32 to vector<2x8xf32>
    %30 = vector.broadcast %cst_13 : f32 to vector<2x8xf32>
    %31 = arith.select %28, %29, %30 : vector<2x8xi1>, vector<2x8xf32>
    %32 = arith.truncf %24 : vector<16x32xf32> to vector<16x32xbf16>
    %c0_14 = arith.constant 0 : index
    %c0_15 = arith.constant 0 : index
    %c0_16 = arith.constant 0 : index
    %33 = vector.load %arg3[%c0_14, %c0_15, %c0_16] : memref<2x32x96xbf16, #tpu.memory_space<vmem>>, vector<1x32x96xbf16>
    %34 = vector.shape_cast %33 : vector<1x32x96xbf16> to vector<32x96xbf16>
    %cst_17 = arith.constant dense<0.000000e+00> : vector<16x96xf32>
    %35 = tpu.matmul %32, %34, %cst_17 {dimension_numbers = #tpu.dot_dimension_numbers<[1], [0], [0], [1], [0, 0, 1, 1], [], []>} : vector<16x32xbf16>, vector<32x96xbf16>, vector<16x96xf32> -> vector<16x96xf32>
    %c2 = arith.constant 2 : index
    %c0_18 = arith.constant 0 : index
    %36 = vector.load %arg7[%c2, %c0_18] : memref<18x128xf32, #tpu.memory_space<vmem>>, vector<1x96xf32>
    %37 = vector.broadcast %36 : vector<1x96xf32> to vector<16x96xf32>
    %38 = arith.addf %35, %37 : vector<16x96xf32>
    %39 = vector.extract_strided_slice %25 {offsets = [0, 0], sizes = [1, 8], strides = [1, 1]} : vector<2x8xf32> to vector<1x8xf32>
    %40 = vector.extract_strided_slice %31 {offsets = [0, 0], sizes = [1, 8], strides = [1, 1]} : vector<2x8xf32> to vector<1x8xf32>
    %41 = vector.extract_strided_slice %38 {offsets = [0, 0], sizes = [8, 8], strides = [1, 1]} : vector<16x96xf32> to vector<8x8xf32>
    %42 = vector.extract_strided_slice %38 {offsets = [0, 32], sizes = [8, 8], strides = [1, 1]} : vector<16x96xf32> to vector<8x8xf32>
    %43 = vector.extract_strided_slice %38 {offsets = [0, 64], sizes = [8, 8], strides = [1, 1]} : vector<16x96xf32> to vector<8x8xf32>
    %cst_19 = arith.constant dense<0.000000e+00> : vector<8x8xf32>
    %44 = tpu.matmul %41, %42, %cst_19 {dimension_numbers = #tpu.dot_dimension_numbers<[1], [1], [0], [0], [0, 0, 1, 0], [], []>} : vector<8x8xf32>, vector<8x8xf32>, vector<8x8xf32> -> vector<8x8xf32>
    %cst_20 = arith.constant 0.353553385 : f32
    %45 = vector.broadcast %cst_20 : f32 to vector<8x8xf32>
    %46 = arith.mulf %44, %45 : vector<8x8xf32>
    %cst_21 = arith.constant 2.500000e-01 : f32
    %47 = vector.broadcast %cst_21 : f32 to vector<1x8xf32>
    %48 = arith.mulf %47, %39 : vector<1x8xf32>
    %49 = arith.addf %48, %40 : vector<1x8xf32>
    %50 = vector.broadcast %49 : vector<1x8xf32> to vector<8x8xf32>
    %51 = arith.addf %46, %50 : vector<8x8xf32>
    %cst_22 = arith.constant dense<0xFF800000> : vector<8xf32>
    %52 = vector.multi_reduction <maximumf>, %51, %cst_22 [1] : vector<8x8xf32> to vector<8xf32>
    %53 = vector.shape_cast %52 : vector<8xf32> to vector<8x1xf32>
    %54 = vector.broadcast %53 : vector<8x1xf32> to vector<8x8xf32>
    %55 = arith.subf %51, %54 : vector<8x8xf32>
    %56 = math.exp %55 : vector<8x8xf32>
    %cst_23 = arith.constant dense<0.000000e+00> : vector<8xf32>
    %57 = vector.multi_reduction <add>, %56, %cst_23 [1] : vector<8x8xf32> to vector<8xf32>
    %58 = vector.shape_cast %57 : vector<8xf32> to vector<8x1xf32>
    %59 = tpu.reciprocal %58 {approx = true} : vector<8x1xf32> -> vector<8x1xf32>
    %60 = vector.broadcast %59 : vector<8x1xf32> to vector<8x8xf32>
    %61 = arith.mulf %56, %60 : vector<8x8xf32>
    %cst_24 = arith.constant dense<0.000000e+00> : vector<8x8xf32>
    %62 = tpu.matmul %61, %43, %cst_24 {dimension_numbers = #tpu.dot_dimension_numbers<[1], [0], [0], [1], [0, 0, 1, 1], [], []>} : vector<8x8xf32>, vector<8x8xf32>, vector<8x8xf32> -> vector<8x8xf32>
    %c0_25 = arith.constant 0 : index
    %c0_26 = arith.constant 0 : index
    %63 = vector.load %arg9[%c0_25, %c0_26] : memref<16x32xf32, #tpu.memory_space<vmem>>, vector<8x8xf32>
    tpu.vector_store %arg9[%c0_25, %c0_26], %62 {strides = array<i32>} : memref<16x32xf32, #tpu.memory_space<vmem>>, vector<8x8xf32>,
    %64 = vector.extract_strided_slice %38 {offsets = [0, 8], sizes = [8, 8], strides = [1, 1]} : vector<16x96xf32> to vector<8x8xf32>
    %65 = vector.extract_strided_slice %38 {offsets = [0, 40], sizes = [8, 8], strides = [1, 1]} : vector<16x96xf32> to vector<8x8xf32>
    %66 = vector.extract_strided_slice %38 {offsets = [0, 72], sizes = [8, 8], strides = [1, 1]} : vector<16x96xf32> to vector<8x8xf32>
    %cst_27 = arith.constant dense<0.000000e+00> : vector<8x8xf32>
    %67 = tpu.matmul %64, %65, %cst_27 {dimension_numbers = #tpu.dot_dimension_numbers<[1], [1], [0], [0], [0, 0, 1, 0], [], []>} : vector<8x8xf32>, vector<8x8xf32>, vector<8x8xf32> -> vector<8x8xf32>
    %cst_28 = arith.constant 0.353553385 : f32
    %68 = vector.broadcast %cst_28 : f32 to vector<8x8xf32>
    %69 = arith.mulf %67, %68 : vector<8x8xf32>
    %cst_29 = arith.constant 6.250000e-02 : f32
    %70 = vector.broadcast %cst_29 : f32 to vector<1x8xf32>
    %71 = arith.mulf %70, %39 : vector<1x8xf32>
    %72 = arith.addf %71, %40 : vector<1x8xf32>
    %73 = vector.broadcast %72 : vector<1x8xf32> to vector<8x8xf32>
    %74 = arith.addf %69, %73 : vector<8x8xf32>
    %cst_30 = arith.constant dense<0xFF800000> : vector<8xf32>
    %75 = vector.multi_reduction <maximumf>, %74, %cst_30 [1] : vector<8x8xf32> to vector<8xf32>
    %76 = vector.shape_cast %75 : vector<8xf32> to vector<8x1xf32>
    %77 = vector.broadcast %76 : vector<8x1xf32> to vector<8x8xf32>
    %78 = arith.subf %74, %77 : vector<8x8xf32>
    %79 = math.exp %78 : vector<8x8xf32>
    %cst_31 = arith.constant dense<0.000000e+00> : vector<8xf32>
    %80 = vector.multi_reduction <add>, %79, %cst_31 [1] : vector<8x8xf32> to vector<8xf32>
    %81 = vector.shape_cast %80 : vector<8xf32> to vector<8x1xf32>
    %82 = tpu.reciprocal %81 {approx = true} : vector<8x1xf32> -> vector<8x1xf32>
    %83 = vector.broadcast %82 : vector<8x1xf32> to vector<8x8xf32>
    %84 = arith.mulf %79, %83 : vector<8x8xf32>
    %cst_32 = arith.constant dense<0.000000e+00> : vector<8x8xf32>
    %85 = tpu.matmul %84, %66, %cst_32 {dimension_numbers = #tpu.dot_dimension_numbers<[1], [0], [0], [1], [0, 0, 1, 1], [], []>} : vector<8x8xf32>, vector<8x8xf32>, vector<8x8xf32> -> vector<8x8xf32>
    %c0_33 = arith.constant 0 : index
    %c8 = arith.constant 8 : index
    %86 = vector.load %arg9[%c0_33, %c8] : memref<16x32xf32, #tpu.memory_space<vmem>>, vector<8x8xf32>
    tpu.vector_store %arg9[%c0_33, %c8], %85 {strides = array<i32>} : memref<16x32xf32, #tpu.memory_space<vmem>>, vector<8x8xf32>,
    %87 = vector.extract_strided_slice %38 {offsets = [0, 16], sizes = [8, 8], strides = [1, 1]} : vector<16x96xf32> to vector<8x8xf32>
    %88 = vector.extract_strided_slice %38 {offsets = [0, 48], sizes = [8, 8], strides = [1, 1]} : vector<16x96xf32> to vector<8x8xf32>
    %89 = vector.extract_strided_slice %38 {offsets = [0, 80], sizes = [8, 8], strides = [1, 1]} : vector<16x96xf32> to vector<8x8xf32>
    %cst_34 = arith.constant dense<0.000000e+00> : vector<8x8xf32>
    %90 = tpu.matmul %87, %88, %cst_34 {dimension_numbers = #tpu.dot_dimension_numbers<[1], [1], [0], [0], [0, 0, 1, 0], [], []>} : vector<8x8xf32>, vector<8x8xf32>, vector<8x8xf32> -> vector<8x8xf32>
    %cst_35 = arith.constant 0.353553385 : f32
    %91 = vector.broadcast %cst_35 : f32 to vector<8x8xf32>
    %92 = arith.mulf %90, %91 : vector<8x8xf32>
    %cst_36 = arith.constant 1.562500e-02 : f32
    %93 = vector.broadcast %cst_36 : f32 to vector<1x8xf32>
    %94 = arith.mulf %93, %39 : vector<1x8xf32>
    %95 = arith.addf %94, %40 : vector<1x8xf32>
    %96 = vector.broadcast %95 : vector<1x8xf32> to vector<8x8xf32>
    %97 = arith.addf %92, %96 : vector<8x8xf32>
    %cst_37 = arith.constant dense<0xFF800000> : vector<8xf32>
    %98 = vector.multi_reduction <maximumf>, %97, %cst_37 [1] : vector<8x8xf32> to vector<8xf32>
    %99 = vector.shape_cast %98 : vector<8xf32> to vector<8x1xf32>
    %100 = vector.broadcast %99 : vector<8x1xf32> to vector<8x8xf32>
    %101 = arith.subf %97, %100 : vector<8x8xf32>
    %102 = math.exp %101 : vector<8x8xf32>
    %cst_38 = arith.constant dense<0.000000e+00> : vector<8xf32>
    %103 = vector.multi_reduction <add>, %102, %cst_38 [1] : vector<8x8xf32> to vector<8xf32>
    %104 = vector.shape_cast %103 : vector<8xf32> to vector<8x1xf32>
    %105 = tpu.reciprocal %104 {approx = true} : vector<8x1xf32> -> vector<8x1xf32>
    %106 = vector.broadcast %105 : vector<8x1xf32> to vector<8x8xf32>
    %107 = arith.mulf %102, %106 : vector<8x8xf32>
    %cst_39 = arith.constant dense<0.000000e+00> : vector<8x8xf32>
    %108 = tpu.matmul %107, %89, %cst_39 {dimension_numbers = #tpu.dot_dimension_numbers<[1], [0], [0], [1], [0, 0, 1, 1], [], []>} : vector<8x8xf32>, vector<8x8xf32>, vector<8x8xf32> -> vector<8x8xf32>
    %c0_40 = arith.constant 0 : index
    %c16 = arith.constant 16 : index
    %109 = vector.load %arg9[%c0_40, %c16] : memref<16x32xf32, #tpu.memory_space<vmem>>, vector<8x8xf32>
    tpu.vector_store %arg9[%c0_40, %c16], %108 {strides = array<i32>} : memref<16x32xf32, #tpu.memory_space<vmem>>, vector<8x8xf32>,
    %110 = vector.extract_strided_slice %38 {offsets = [0, 24], sizes = [8, 8], strides = [1, 1]} : vector<16x96xf32> to vector<8x8xf32>
    %111 = vector.extract_strided_slice %38 {offsets = [0, 56], sizes = [8, 8], strides = [1, 1]} : vector<16x96xf32> to vector<8x8xf32>
    %112 = vector.extract_strided_slice %38 {offsets = [0, 88], sizes = [8, 8], strides = [1, 1]} : vector<16x96xf32> to vector<8x8xf32>
    %cst_41 = arith.constant dense<0.000000e+00> : vector<8x8xf32>
    %113 = tpu.matmul %110, %111, %cst_41 {dimension_numbers = #tpu.dot_dimension_numbers<[1], [1], [0], [0], [0, 0, 1, 0], [], []>} : vector<8x8xf32>, vector<8x8xf32>, vector<8x8xf32> -> vector<8x8xf32>
    %cst_42 = arith.constant 0.353553385 : f32
    %114 = vector.broadcast %cst_42 : f32 to vector<8x8xf32>
    %115 = arith.mulf %113, %114 : vector<8x8xf32>
    %cst_43 = arith.constant 3.906250e-03 : f32
    %116 = vector.broadcast %cst_43 : f32 to vector<1x8xf32>
    %117 = arith.mulf %116, %39 : vector<1x8xf32>
    %118 = arith.addf %117, %40 : vector<1x8xf32>
    %119 = vector.broadcast %118 : vector<1x8xf32> to vector<8x8xf32>
    %120 = arith.addf %115, %119 : vector<8x8xf32>
    %cst_44 = arith.constant dense<0xFF800000> : vector<8xf32>
    %121 = vector.multi_reduction <maximumf>, %120, %cst_44 [1] : vector<8x8xf32> to vector<8xf32>
    %122 = vector.shape_cast %121 : vector<8xf32> to vector<8x1xf32>
    %123 = vector.broadcast %122 : vector<8x1xf32> to vector<8x8xf32>
    %124 = arith.subf %120, %123 : vector<8x8xf32>
    %125 = math.exp %124 : vector<8x8xf32>
    %cst_45 = arith.constant dense<0.000000e+00> : vector<8xf32>
    %126 = vector.multi_reduction <add>, %125, %cst_45 [1] : vector<8x8xf32> to vector<8xf32>
    %127 = vector.shape_cast %126 : vector<8xf32> to vector<8x1xf32>
    %128 = tpu.reciprocal %127 {approx = true} : vector<8x1xf32> -> vector<8x1xf32>
    %129 = vector.broadcast %128 : vector<8x1xf32> to vector<8x8xf32>
    %130 = arith.mulf %125, %129 : vector<8x8xf32>
    %cst_46 = arith.constant dense<0.000000e+00> : vector<8x8xf32>
    %131 = tpu.matmul %130, %112, %cst_46 {dimension_numbers = #tpu.dot_dimension_numbers<[1], [0], [0], [1], [0, 0, 1, 1], [], []>} : vector<8x8xf32>, vector<8x8xf32>, vector<8x8xf32> -> vector<8x8xf32>
    %c0_47 = arith.constant 0 : index
    %c24 = arith.constant 24 : index
    %132 = vector.load %arg9[%c0_47, %c24] : memref<16x32xf32, #tpu.memory_space<vmem>>, vector<8x8xf32>
    tpu.vector_store %arg9[%c0_47, %c24], %131 {strides = array<i32>} : memref<16x32xf32, #tpu.memory_space<vmem>>, vector<8x8xf32>,
    %133 = vector.extract_strided_slice %25 {offsets = [1, 0], sizes = [1, 8], strides = [1, 1]} : vector<2x8xf32> to vector<1x8xf32>
    %134 = vector.extract_strided_slice %31 {offsets = [1, 0], sizes = [1, 8], strides = [1, 1]} : vector<2x8xf32> to vector<1x8xf32>
    %135 = vector.extract_strided_slice %38 {offsets = [8, 0], sizes = [8, 8], strides = [1, 1]} : vector<16x96xf32> to vector<8x8xf32>
    %136 = vector.extract_strided_slice %38 {offsets = [8, 32], sizes = [8, 8], strides = [1, 1]} : vector<16x96xf32> to vector<8x8xf32>
    %137 = vector.extract_strided_slice %38 {offsets = [8, 64], sizes = [8, 8], strides = [1, 1]} : vector<16x96xf32> to vector<8x8xf32>
    %cst_48 = arith.constant dense<0.000000e+00> : vector<8x8xf32>
    %138 = tpu.matmul %135, %136, %cst_48 {dimension_numbers = #tpu.dot_dimension_numbers<[1], [1], [0], [0], [0, 0, 1, 0], [], []>} : vector<8x8xf32>, vector<8x8xf32>, vector<8x8xf32> -> vector<8x8xf32>
    %cst_49 = arith.constant 0.353553385 : f32
    %139 = vector.broadcast %cst_49 : f32 to vector<8x8xf32>
    %140 = arith.mulf %138, %139 : vector<8x8xf32>
    %cst_50 = arith.constant 2.500000e-01 : f32
    %141 = vector.broadcast %cst_50 : f32 to vector<1x8xf32>
    %142 = arith.mulf %141, %133 : vector<1x8xf32>
    %143 = arith.addf %142, %134 : vector<1x8xf32>
    %144 = vector.broadcast %143 : vector<1x8xf32> to vector<8x8xf32>
    %145 = arith.addf %140, %144 : vector<8x8xf32>
    %cst_51 = arith.constant dense<0xFF800000> : vector<8xf32>
    %146 = vector.multi_reduction <maximumf>, %145, %cst_51 [1] : vector<8x8xf32> to vector<8xf32>
    %147 = vector.shape_cast %146 : vector<8xf32> to vector<8x1xf32>
    %148 = vector.broadcast %147 : vector<8x1xf32> to vector<8x8xf32>
    %149 = arith.subf %145, %148 : vector<8x8xf32>
    %150 = math.exp %149 : vector<8x8xf32>
    %cst_52 = arith.constant dense<0.000000e+00> : vector<8xf32>
    %151 = vector.multi_reduction <add>, %150, %cst_52 [1] : vector<8x8xf32> to vector<8xf32>
    %152 = vector.shape_cast %151 : vector<8xf32> to vector<8x1xf32>
    %153 = tpu.reciprocal %152 {approx = true} : vector<8x1xf32> -> vector<8x1xf32>
    %154 = vector.broadcast %153 : vector<8x1xf32> to vector<8x8xf32>
    %155 = arith.mulf %150, %154 : vector<8x8xf32>
    %cst_53 = arith.constant dense<0.000000e+00> : vector<8x8xf32>
    %156 = tpu.matmul %155, %137, %cst_53 {dimension_numbers = #tpu.dot_dimension_numbers<[1], [0], [0], [1], [0, 0, 1, 1], [], []>} : vector<8x8xf32>, vector<8x8xf32>, vector<8x8xf32> -> vector<8x8xf32>
    %c8_54 = arith.constant 8 : index
    %c0_55 = arith.constant 0 : index
    %157 = vector.load %arg9[%c8_54, %c0_55] : memref<16x32xf32, #tpu.memory_space<vmem>>, vector<8x8xf32>
    tpu.vector_store %arg9[%c8_54, %c0_55], %156 {strides = array<i32>} : memref<16x32xf32, #tpu.memory_space<vmem>>, vector<8x8xf32>,
    %158 = vector.extract_strided_slice %38 {offsets = [8, 8], sizes = [8, 8], strides = [1, 1]} : vector<16x96xf32> to vector<8x8xf32>
    %159 = vector.extract_strided_slice %38 {offsets = [8, 40], sizes = [8, 8], strides = [1, 1]} : vector<16x96xf32> to vector<8x8xf32>
    %160 = vector.extract_strided_slice %38 {offsets = [8, 72], sizes = [8, 8], strides = [1, 1]} : vector<16x96xf32> to vector<8x8xf32>
    %cst_56 = arith.constant dense<0.000000e+00> : vector<8x8xf32>
    %161 = tpu.matmul %158, %159, %cst_56 {dimension_numbers = #tpu.dot_dimension_numbers<[1], [1], [0], [0], [0, 0, 1, 0], [], []>} : vector<8x8xf32>, vector<8x8xf32>, vector<8x8xf32> -> vector<8x8xf32>
    %cst_57 = arith.constant 0.353553385 : f32
    %162 = vector.broadcast %cst_57 : f32 to vector<8x8xf32>
    %163 = arith.mulf %161, %162 : vector<8x8xf32>
    %cst_58 = arith.constant 6.250000e-02 : f32
    %164 = vector.broadcast %cst_58 : f32 to vector<1x8xf32>
    %165 = arith.mulf %164, %133 : vector<1x8xf32>
    %166 = arith.addf %165, %134 : vector<1x8xf32>
    %167 = vector.broadcast %166 : vector<1x8xf32> to vector<8x8xf32>
    %168 = arith.addf %163, %167 : vector<8x8xf32>
    %cst_59 = arith.constant dense<0xFF800000> : vector<8xf32>
    %169 = vector.multi_reduction <maximumf>, %168, %cst_59 [1] : vector<8x8xf32> to vector<8xf32>
    %170 = vector.shape_cast %169 : vector<8xf32> to vector<8x1xf32>
    %171 = vector.broadcast %170 : vector<8x1xf32> to vector<8x8xf32>
    %172 = arith.subf %168, %171 : vector<8x8xf32>
    %173 = math.exp %172 : vector<8x8xf32>
    %cst_60 = arith.constant dense<0.000000e+00> : vector<8xf32>
    %174 = vector.multi_reduction <add>, %173, %cst_60 [1] : vector<8x8xf32> to vector<8xf32>
    %175 = vector.shape_cast %174 : vector<8xf32> to vector<8x1xf32>
    %176 = tpu.reciprocal %175 {approx = true} : vector<8x1xf32> -> vector<8x1xf32>
    %177 = vector.broadcast %176 : vector<8x1xf32> to vector<8x8xf32>
    %178 = arith.mulf %173, %177 : vector<8x8xf32>
    %cst_61 = arith.constant dense<0.000000e+00> : vector<8x8xf32>
    %179 = tpu.matmul %178, %160, %cst_61 {dimension_numbers = #tpu.dot_dimension_numbers<[1], [0], [0], [1], [0, 0, 1, 1], [], []>} : vector<8x8xf32>, vector<8x8xf32>, vector<8x8xf32> -> vector<8x8xf32>
    %c8_62 = arith.constant 8 : index
    %c8_63 = arith.constant 8 : index
    %180 = vector.load %arg9[%c8_62, %c8_63] : memref<16x32xf32, #tpu.memory_space<vmem>>, vector<8x8xf32>
    tpu.vector_store %arg9[%c8_62, %c8_63], %179 {strides = array<i32>} : memref<16x32xf32, #tpu.memory_space<vmem>>, vector<8x8xf32>,
    %181 = vector.extract_strided_slice %38 {offsets = [8, 16], sizes = [8, 8], strides = [1, 1]} : vector<16x96xf32> to vector<8x8xf32>
    %182 = vector.extract_strided_slice %38 {offsets = [8, 48], sizes = [8, 8], strides = [1, 1]} : vector<16x96xf32> to vector<8x8xf32>
    %183 = vector.extract_strided_slice %38 {offsets = [8, 80], sizes = [8, 8], strides = [1, 1]} : vector<16x96xf32> to vector<8x8xf32>
    %cst_64 = arith.constant dense<0.000000e+00> : vector<8x8xf32>
    %184 = tpu.matmul %181, %182, %cst_64 {dimension_numbers = #tpu.dot_dimension_numbers<[1], [1], [0], [0], [0, 0, 1, 0], [], []>} : vector<8x8xf32>, vector<8x8xf32>, vector<8x8xf32> -> vector<8x8xf32>
    %cst_65 = arith.constant 0.353553385 : f32
    %185 = vector.broadcast %cst_65 : f32 to vector<8x8xf32>
    %186 = arith.mulf %184, %185 : vector<8x8xf32>
    %cst_66 = arith.constant 1.562500e-02 : f32
    %187 = vector.broadcast %cst_66 : f32 to vector<1x8xf32>
    %188 = arith.mulf %187, %133 : vector<1x8xf32>
    %189 = arith.addf %188, %134 : vector<1x8xf32>
    %190 = vector.broadcast %189 : vector<1x8xf32> to vector<8x8xf32>
    %191 = arith.addf %186, %190 : vector<8x8xf32>
    %cst_67 = arith.constant dense<0xFF800000> : vector<8xf32>
    %192 = vector.multi_reduction <maximumf>, %191, %cst_67 [1] : vector<8x8xf32> to vector<8xf32>
    %193 = vector.shape_cast %192 : vector<8xf32> to vector<8x1xf32>
    %194 = vector.broadcast %193 : vector<8x1xf32> to vector<8x8xf32>
    %195 = arith.subf %191, %194 : vector<8x8xf32>
    %196 = math.exp %195 : vector<8x8xf32>
    %cst_68 = arith.constant dense<0.000000e+00> : vector<8xf32>
    %197 = vector.multi_reduction <add>, %196, %cst_68 [1] : vector<8x8xf32> to vector<8xf32>
    %198 = vector.shape_cast %197 : vector<8xf32> to vector<8x1xf32>
    %199 = tpu.reciprocal %198 {approx = true} : vector<8x1xf32> -> vector<8x1xf32>
    %200 = vector.broadcast %199 : vector<8x1xf32> to vector<8x8xf32>
    %201 = arith.mulf %196, %200 : vector<8x8xf32>
    %cst_69 = arith.constant dense<0.000000e+00> : vector<8x8xf32>
    %202 = tpu.matmul %201, %183, %cst_69 {dimension_numbers = #tpu.dot_dimension_numbers<[1], [0], [0], [1], [0, 0, 1, 1], [], []>} : vector<8x8xf32>, vector<8x8xf32>, vector<8x8xf32> -> vector<8x8xf32>
    %c8_70 = arith.constant 8 : index
    %c16_71 = arith.constant 16 : index
    %203 = vector.load %arg9[%c8_70, %c16_71] : memref<16x32xf32, #tpu.memory_space<vmem>>, vector<8x8xf32>
    tpu.vector_store %arg9[%c8_70, %c16_71], %202 {strides = array<i32>} : memref<16x32xf32, #tpu.memory_space<vmem>>, vector<8x8xf32>,
    %204 = vector.extract_strided_slice %38 {offsets = [8, 24], sizes = [8, 8], strides = [1, 1]} : vector<16x96xf32> to vector<8x8xf32>
    %205 = vector.extract_strided_slice %38 {offsets = [8, 56], sizes = [8, 8], strides = [1, 1]} : vector<16x96xf32> to vector<8x8xf32>
    %206 = vector.extract_strided_slice %38 {offsets = [8, 88], sizes = [8, 8], strides = [1, 1]} : vector<16x96xf32> to vector<8x8xf32>
    %cst_72 = arith.constant dense<0.000000e+00> : vector<8x8xf32>
    %207 = tpu.matmul %204, %205, %cst_72 {dimension_numbers = #tpu.dot_dimension_numbers<[1], [1], [0], [0], [0, 0, 1, 0], [], []>} : vector<8x8xf32>, vector<8x8xf32>, vector<8x8xf32> -> vector<8x8xf32>
    %cst_73 = arith.constant 0.353553385 : f32
    %208 = vector.broadcast %cst_73 : f32 to vector<8x8xf32>
    %209 = arith.mulf %207, %208 : vector<8x8xf32>
    %cst_74 = arith.constant 3.906250e-03 : f32
    %210 = vector.broadcast %cst_74 : f32 to vector<1x8xf32>
    %211 = arith.mulf %210, %133 : vector<1x8xf32>
    %212 = arith.addf %211, %134 : vector<1x8xf32>
    %213 = vector.broadcast %212 : vector<1x8xf32> to vector<8x8xf32>
    %214 = arith.addf %209, %213 : vector<8x8xf32>
    %cst_75 = arith.constant dense<0xFF800000> : vector<8xf32>
    %215 = vector.multi_reduction <maximumf>, %214, %cst_75 [1] : vector<8x8xf32> to vector<8xf32>
    %216 = vector.shape_cast %215 : vector<8xf32> to vector<8x1xf32>
    %217 = vector.broadcast %216 : vector<8x1xf32> to vector<8x8xf32>
    %218 = arith.subf %214, %217 : vector<8x8xf32>
    %219 = math.exp %218 : vector<8x8xf32>
    %cst_76 = arith.constant dense<0.000000e+00> : vector<8xf32>
    %220 = vector.multi_reduction <add>, %219, %cst_76 [1] : vector<8x8xf32> to vector<8xf32>
    %221 = vector.shape_cast %220 : vector<8xf32> to vector<8x1xf32>
    %222 = tpu.reciprocal %221 {approx = true} : vector<8x1xf32> -> vector<8x1xf32>
    %223 = vector.broadcast %222 : vector<8x1xf32> to vector<8x8xf32>
    %224 = arith.mulf %219, %223 : vector<8x8xf32>
    %cst_77 = arith.constant dense<0.000000e+00> : vector<8x8xf32>
    %225 = tpu.matmul %224, %206, %cst_77 {dimension_numbers = #tpu.dot_dimension_numbers<[1], [0], [0], [1], [0, 0, 1, 1], [], []>} : vector<8x8xf32>, vector<8x8xf32>, vector<8x8xf32> -> vector<8x8xf32>
    %c8_78 = arith.constant 8 : index
    %c24_79 = arith.constant 24 : index
    %226 = vector.load %arg9[%c8_78, %c24_79] : memref<16x32xf32, #tpu.memory_space<vmem>>, vector<8x8xf32>
    tpu.vector_store %arg9[%c8_78, %c24_79], %225 {strides = array<i32>} : memref<16x32xf32, #tpu.memory_space<vmem>>, vector<8x8xf32>,
    %c0_80 = arith.constant 0 : index
    %c0_81 = arith.constant 0 : index
    %227 = vector.load %arg9[%c0_80, %c0_81] : memref<16x32xf32, #tpu.memory_space<vmem>>, vector<16x32xf32>
    %228 = arith.truncf %227 : vector<16x32xf32> to vector<16x32xbf16>
    %c0_82 = arith.constant 0 : index
    %c0_83 = arith.constant 0 : index
    %c0_84 = arith.constant 0 : index
    %229 = vector.load %arg4[%c0_82, %c0_83, %c0_84] : memref<2x32x32xbf16, #tpu.memory_space<vmem>>, vector<1x32x32xbf16>
    %230 = vector.shape_cast %229 : vector<1x32x32xbf16> to vector<32x32xbf16>
    %cst_85 = arith.constant dense<0.000000e+00> : vector<16x32xf32>
    %231 = tpu.matmul %228, %230, %cst_85 {dimension_numbers = #tpu.dot_dimension_numbers<[1], [0], [0], [1], [0, 0, 1, 1], [], []>} : vector<16x32xbf16>, vector<32x32xbf16>, vector<16x32xf32> -> vector<16x32xf32>
    %c3 = arith.constant 3 : index
    %c0_86 = arith.constant 0 : index
    %232 = vector.load %arg7[%c3, %c0_86] : memref<18x128xf32, #tpu.memory_space<vmem>>, vector<1x32xf32>
    %233 = vector.broadcast %232 : vector<1x32xf32> to vector<16x32xf32>
    %234 = arith.addf %231, %233 : vector<16x32xf32>
    %235 = arith.addf %24, %234 : vector<16x32xf32>
    %c4 = arith.constant 4 : index
    %c0_87 = arith.constant 0 : index
    %236 = vector.load %arg7[%c4, %c0_87] : memref<18x128xf32, #tpu.memory_space<vmem>>, vector<1x32xf32>
    %c5 = arith.constant 5 : index
    %c0_88 = arith.constant 0 : index
    %237 = vector.load %arg7[%c5, %c0_88] : memref<18x128xf32, #tpu.memory_space<vmem>>, vector<1x32xf32>
    %cst_89 = arith.constant dense<0.000000e+00> : vector<16xf32>
    %238 = vector.multi_reduction <add>, %235, %cst_89 [1] : vector<16x32xf32> to vector<16xf32>
    %239 = vector.shape_cast %238 : vector<16xf32> to vector<16x1xf32>
    %cst_90 = arith.constant 3.200000e+01 : f32
    %240 = vector.broadcast %cst_90 : f32 to vector<16x1xf32>
    %241 = arith.divf %239, %240 : vector<16x1xf32>
    %242 = vector.broadcast %241 : vector<16x1xf32> to vector<16x32xf32>
    %243 = arith.subf %235, %242 : vector<16x32xf32>
    %244 = arith.mulf %243, %243 : vector<16x32xf32>
    %cst_91 = arith.constant dense<0.000000e+00> : vector<16xf32>
    %245 = vector.multi_reduction <add>, %244, %cst_91 [1] : vector<16x32xf32> to vector<16xf32>
    %246 = vector.shape_cast %245 : vector<16xf32> to vector<16x1xf32>
    %cst_92 = arith.constant 3.200000e+01 : f32
    %247 = vector.broadcast %cst_92 : f32 to vector<16x1xf32>
    %248 = arith.divf %246, %247 : vector<16x1xf32>
    %249 = vector.broadcast %241 : vector<16x1xf32> to vector<16x32xf32>
    %250 = arith.subf %235, %249 : vector<16x32xf32>
    %cst_93 = arith.constant 9.99999974E-6 : f32
    %251 = vector.broadcast %cst_93 : f32 to vector<16x1xf32>
    %252 = arith.addf %248, %251 : vector<16x1xf32>
    %253 = math.rsqrt %252 : vector<16x1xf32>
    %254 = vector.broadcast %253 : vector<16x1xf32> to vector<16x32xf32>
    %255 = arith.mulf %250, %254 : vector<16x32xf32>
    %256 = vector.broadcast %236 : vector<1x32xf32> to vector<16x32xf32>
    %257 = arith.mulf %255, %256 : vector<16x32xf32>
    %258 = vector.broadcast %237 : vector<1x32xf32> to vector<16x32xf32>
    %259 = arith.addf %257, %258 : vector<16x32xf32>
    %260 = arith.truncf %259 : vector<16x32xf32> to vector<16x32xbf16>
    %c0_94 = arith.constant 0 : index
    %c0_95 = arith.constant 0 : index
    %c0_96 = arith.constant 0 : index
    %261 = vector.load %arg5[%c0_94, %c0_95, %c0_96] : memref<2x32x128xbf16, #tpu.memory_space<vmem>>, vector<1x32x128xbf16>
    %262 = vector.shape_cast %261 : vector<1x32x128xbf16> to vector<32x128xbf16>
    %cst_97 = arith.constant dense<0.000000e+00> : vector<16x128xf32>
    %263 = tpu.matmul %260, %262, %cst_97 {dimension_numbers = #tpu.dot_dimension_numbers<[1], [0], [0], [1], [0, 0, 1, 1], [], []>} : vector<16x32xbf16>, vector<32x128xbf16>, vector<16x128xf32> -> vector<16x128xf32>
    %c8_98 = arith.constant 8 : index
    %c0_99 = arith.constant 0 : index
    %264 = vector.load %arg7[%c8_98, %c0_99] : memref<18x128xf32, #tpu.memory_space<vmem>>, vector<1x128xf32>
    %265 = vector.broadcast %264 : vector<1x128xf32> to vector<16x128xf32>
    %266 = arith.addf %263, %265 : vector<16x128xf32>
    %cst_100 = arith.constant 0.000000e+00 : f32
    %267 = vector.broadcast %cst_100 : f32 to vector<16x128xf32>
    %268 = arith.maximumf %266, %267 : vector<16x128xf32>
    %269 = arith.truncf %268 : vector<16x128xf32> to vector<16x128xbf16>
    %c0_101 = arith.constant 0 : index
    %c0_102 = arith.constant 0 : index
    %c0_103 = arith.constant 0 : index
    %270 = vector.load %arg6[%c0_101, %c0_102, %c0_103] : memref<2x128x32xbf16, #tpu.memory_space<vmem>>, vector<1x128x32xbf16>
    %271 = vector.shape_cast %270 : vector<1x128x32xbf16> to vector<128x32xbf16>
    %cst_104 = arith.constant dense<0.000000e+00> : vector<16x32xf32>
    %272 = tpu.matmul %269, %271, %cst_104 {dimension_numbers = #tpu.dot_dimension_numbers<[1], [0], [0], [1], [0, 0, 1, 1], [], []>} : vector<16x128xbf16>, vector<128x32xbf16>, vector<16x32xf32> -> vector<16x32xf32>
    %c9 = arith.constant 9 : index
    %c0_105 = arith.constant 0 : index
    %273 = vector.load %arg7[%c9, %c0_105] : memref<18x128xf32, #tpu.memory_space<vmem>>, vector<1x32xf32>
    %274 = vector.broadcast %273 : vector<1x32xf32> to vector<16x32xf32>
    %275 = arith.addf %272, %274 : vector<16x32xf32>
    %276 = arith.addf %259, %275 : vector<16x32xf32>
    %c6 = arith.constant 6 : index
    %c0_106 = arith.constant 0 : index
    %277 = vector.load %arg7[%c6, %c0_106] : memref<18x128xf32, #tpu.memory_space<vmem>>, vector<1x32xf32>
    %c7 = arith.constant 7 : index
    %c0_107 = arith.constant 0 : index
    %278 = vector.load %arg7[%c7, %c0_107] : memref<18x128xf32, #tpu.memory_space<vmem>>, vector<1x32xf32>
    %cst_108 = arith.constant dense<0.000000e+00> : vector<16xf32>
    %279 = vector.multi_reduction <add>, %276, %cst_108 [1] : vector<16x32xf32> to vector<16xf32>
    %280 = vector.shape_cast %279 : vector<16xf32> to vector<16x1xf32>
    %cst_109 = arith.constant 3.200000e+01 : f32
    %281 = vector.broadcast %cst_109 : f32 to vector<16x1xf32>
    %282 = arith.divf %280, %281 : vector<16x1xf32>
    %283 = vector.broadcast %282 : vector<16x1xf32> to vector<16x32xf32>
    %284 = arith.subf %276, %283 : vector<16x32xf32>
    %285 = arith.mulf %284, %284 : vector<16x32xf32>
    %cst_110 = arith.constant dense<0.000000e+00> : vector<16xf32>
    %286 = vector.multi_reduction <add>, %285, %cst_110 [1] : vector<16x32xf32> to vector<16xf32>
    %287 = vector.shape_cast %286 : vector<16xf32> to vector<16x1xf32>
    %cst_111 = arith.constant 3.200000e+01 : f32
    %288 = vector.broadcast %cst_111 : f32 to vector<16x1xf32>
    %289 = arith.divf %287, %288 : vector<16x1xf32>
    %290 = vector.broadcast %282 : vector<16x1xf32> to vector<16x32xf32>
    %291 = arith.subf %276, %290 : vector<16x32xf32>
    %cst_112 = arith.constant 9.99999974E-6 : f32
    %292 = vector.broadcast %cst_112 : f32 to vector<16x1xf32>
    %293 = arith.addf %289, %292 : vector<16x1xf32>
    %294 = math.rsqrt %293 : vector<16x1xf32>
    %295 = vector.broadcast %294 : vector<16x1xf32> to vector<16x32xf32>
    %296 = arith.mulf %291, %295 : vector<16x32xf32>
    %297 = vector.broadcast %277 : vector<1x32xf32> to vector<16x32xf32>
    %298 = arith.mulf %296, %297 : vector<16x32xf32>
    %299 = vector.broadcast %278 : vector<1x32xf32> to vector<16x32xf32>
    %300 = arith.addf %298, %299 : vector<16x32xf32>
    %301 = arith.truncf %300 : vector<16x32xf32> to vector<16x32xbf16>
    %c1_113 = arith.constant 1 : index
    %c0_114 = arith.constant 0 : index
    %c0_115 = arith.constant 0 : index
    %302 = vector.load %arg3[%c1_113, %c0_114, %c0_115] : memref<2x32x96xbf16, #tpu.memory_space<vmem>>, vector<1x32x96xbf16>
    %303 = vector.shape_cast %302 : vector<1x32x96xbf16> to vector<32x96xbf16>
    %cst_116 = arith.constant dense<0.000000e+00> : vector<16x96xf32>
    %304 = tpu.matmul %301, %303, %cst_116 {dimension_numbers = #tpu.dot_dimension_numbers<[1], [0], [0], [1], [0, 0, 1, 1], [], []>} : vector<16x32xbf16>, vector<32x96xbf16>, vector<16x96xf32> -> vector<16x96xf32>
    %c10 = arith.constant 10 : index
    %c0_117 = arith.constant 0 : index
    %305 = vector.load %arg7[%c10, %c0_117] : memref<18x128xf32, #tpu.memory_space<vmem>>, vector<1x96xf32>
    %306 = vector.broadcast %305 : vector<1x96xf32> to vector<16x96xf32>
    %307 = arith.addf %304, %306 : vector<16x96xf32>
    %308 = vector.extract_strided_slice %25 {offsets = [0, 0], sizes = [1, 8], strides = [1, 1]} : vector<2x8xf32> to vector<1x8xf32>
    %309 = vector.extract_strided_slice %31 {offsets = [0, 0], sizes = [1, 8], strides = [1, 1]} : vector<2x8xf32> to vector<1x8xf32>
    %310 = vector.extract_strided_slice %307 {offsets = [0, 0], sizes = [8, 8], strides = [1, 1]} : vector<16x96xf32> to vector<8x8xf32>
    %311 = vector.extract_strided_slice %307 {offsets = [0, 32], sizes = [8, 8], strides = [1, 1]} : vector<16x96xf32> to vector<8x8xf32>
    %312 = vector.extract_strided_slice %307 {offsets = [0, 64], sizes = [8, 8], strides = [1, 1]} : vector<16x96xf32> to vector<8x8xf32>
    %cst_118 = arith.constant dense<0.000000e+00> : vector<8x8xf32>
    %313 = tpu.matmul %310, %311, %cst_118 {dimension_numbers = #tpu.dot_dimension_numbers<[1], [1], [0], [0], [0, 0, 1, 0], [], []>} : vector<8x8xf32>, vector<8x8xf32>, vector<8x8xf32> -> vector<8x8xf32>
    %cst_119 = arith.constant 0.353553385 : f32
    %314 = vector.broadcast %cst_119 : f32 to vector<8x8xf32>
    %315 = arith.mulf %313, %314 : vector<8x8xf32>
    %cst_120 = arith.constant 2.500000e-01 : f32
    %316 = vector.broadcast %cst_120 : f32 to vector<1x8xf32>
    %317 = arith.mulf %316, %308 : vector<1x8xf32>
    %318 = arith.addf %317, %309 : vector<1x8xf32>
    %319 = vector.broadcast %318 : vector<1x8xf32> to vector<8x8xf32>
    %320 = arith.addf %315, %319 : vector<8x8xf32>
    %cst_121 = arith.constant dense<0xFF800000> : vector<8xf32>
    %321 = vector.multi_reduction <maximumf>, %320, %cst_121 [1] : vector<8x8xf32> to vector<8xf32>
    %322 = vector.shape_cast %321 : vector<8xf32> to vector<8x1xf32>
    %323 = vector.broadcast %322 : vector<8x1xf32> to vector<8x8xf32>
    %324 = arith.subf %320, %323 : vector<8x8xf32>
    %325 = math.exp %324 : vector<8x8xf32>
    %cst_122 = arith.constant dense<0.000000e+00> : vector<8xf32>
    %326 = vector.multi_reduction <add>, %325, %cst_122 [1] : vector<8x8xf32> to vector<8xf32>
    %327 = vector.shape_cast %326 : vector<8xf32> to vector<8x1xf32>
    %328 = tpu.reciprocal %327 {approx = true} : vector<8x1xf32> -> vector<8x1xf32>
    %329 = vector.broadcast %328 : vector<8x1xf32> to vector<8x8xf32>
    %330 = arith.mulf %325, %329 : vector<8x8xf32>
    %cst_123 = arith.constant dense<0.000000e+00> : vector<8x8xf32>
    %331 = tpu.matmul %330, %312, %cst_123 {dimension_numbers = #tpu.dot_dimension_numbers<[1], [0], [0], [1], [0, 0, 1, 1], [], []>} : vector<8x8xf32>, vector<8x8xf32>, vector<8x8xf32> -> vector<8x8xf32>
    %c0_124 = arith.constant 0 : index
    %c0_125 = arith.constant 0 : index
    %332 = vector.load %arg9[%c0_124, %c0_125] : memref<16x32xf32, #tpu.memory_space<vmem>>, vector<8x8xf32>
    tpu.vector_store %arg9[%c0_124, %c0_125], %331 {strides = array<i32>} : memref<16x32xf32, #tpu.memory_space<vmem>>, vector<8x8xf32>,
    %333 = vector.extract_strided_slice %307 {offsets = [0, 8], sizes = [8, 8], strides = [1, 1]} : vector<16x96xf32> to vector<8x8xf32>
    %334 = vector.extract_strided_slice %307 {offsets = [0, 40], sizes = [8, 8], strides = [1, 1]} : vector<16x96xf32> to vector<8x8xf32>
    %335 = vector.extract_strided_slice %307 {offsets = [0, 72], sizes = [8, 8], strides = [1, 1]} : vector<16x96xf32> to vector<8x8xf32>
    %cst_126 = arith.constant dense<0.000000e+00> : vector<8x8xf32>
    %336 = tpu.matmul %333, %334, %cst_126 {dimension_numbers = #tpu.dot_dimension_numbers<[1], [1], [0], [0], [0, 0, 1, 0], [], []>} : vector<8x8xf32>, vector<8x8xf32>, vector<8x8xf32> -> vector<8x8xf32>
    %cst_127 = arith.constant 0.353553385 : f32
    %337 = vector.broadcast %cst_127 : f32 to vector<8x8xf32>
    %338 = arith.mulf %336, %337 : vector<8x8xf32>
    %cst_128 = arith.constant 6.250000e-02 : f32
    %339 = vector.broadcast %cst_128 : f32 to vector<1x8xf32>
    %340 = arith.mulf %339, %308 : vector<1x8xf32>
    %341 = arith.addf %340, %309 : vector<1x8xf32>
    %342 = vector.broadcast %341 : vector<1x8xf32> to vector<8x8xf32>
    %343 = arith.addf %338, %342 : vector<8x8xf32>
    %cst_129 = arith.constant dense<0xFF800000> : vector<8xf32>
    %344 = vector.multi_reduction <maximumf>, %343, %cst_129 [1] : vector<8x8xf32> to vector<8xf32>
    %345 = vector.shape_cast %344 : vector<8xf32> to vector<8x1xf32>
    %346 = vector.broadcast %345 : vector<8x1xf32> to vector<8x8xf32>
    %347 = arith.subf %343, %346 : vector<8x8xf32>
    %348 = math.exp %347 : vector<8x8xf32>
    %cst_130 = arith.constant dense<0.000000e+00> : vector<8xf32>
    %349 = vector.multi_reduction <add>, %348, %cst_130 [1] : vector<8x8xf32> to vector<8xf32>
    %350 = vector.shape_cast %349 : vector<8xf32> to vector<8x1xf32>
    %351 = tpu.reciprocal %350 {approx = true} : vector<8x1xf32> -> vector<8x1xf32>
    %352 = vector.broadcast %351 : vector<8x1xf32> to vector<8x8xf32>
    %353 = arith.mulf %348, %352 : vector<8x8xf32>
    %cst_131 = arith.constant dense<0.000000e+00> : vector<8x8xf32>
    %354 = tpu.matmul %353, %335, %cst_131 {dimension_numbers = #tpu.dot_dimension_numbers<[1], [0], [0], [1], [0, 0, 1, 1], [], []>} : vector<8x8xf32>, vector<8x8xf32>, vector<8x8xf32> -> vector<8x8xf32>
    %c0_132 = arith.constant 0 : index
    %c8_133 = arith.constant 8 : index
    %355 = vector.load %arg9[%c0_132, %c8_133] : memref<16x32xf32, #tpu.memory_space<vmem>>, vector<8x8xf32>
    tpu.vector_store %arg9[%c0_132, %c8_133], %354 {strides = array<i32>} : memref<16x32xf32, #tpu.memory_space<vmem>>, vector<8x8xf32>,
    %356 = vector.extract_strided_slice %307 {offsets = [0, 16], sizes = [8, 8], strides = [1, 1]} : vector<16x96xf32> to vector<8x8xf32>
    %357 = vector.extract_strided_slice %307 {offsets = [0, 48], sizes = [8, 8], strides = [1, 1]} : vector<16x96xf32> to vector<8x8xf32>
    %358 = vector.extract_strided_slice %307 {offsets = [0, 80], sizes = [8, 8], strides = [1, 1]} : vector<16x96xf32> to vector<8x8xf32>
    %cst_134 = arith.constant dense<0.000000e+00> : vector<8x8xf32>
    %359 = tpu.matmul %356, %357, %cst_134 {dimension_numbers = #tpu.dot_dimension_numbers<[1], [1], [0], [0], [0, 0, 1, 0], [], []>} : vector<8x8xf32>, vector<8x8xf32>, vector<8x8xf32> -> vector<8x8xf32>
    %cst_135 = arith.constant 0.353553385 : f32
    %360 = vector.broadcast %cst_135 : f32 to vector<8x8xf32>
    %361 = arith.mulf %359, %360 : vector<8x8xf32>
    %cst_136 = arith.constant 1.562500e-02 : f32
    %362 = vector.broadcast %cst_136 : f32 to vector<1x8xf32>
    %363 = arith.mulf %362, %308 : vector<1x8xf32>
    %364 = arith.addf %363, %309 : vector<1x8xf32>
    %365 = vector.broadcast %364 : vector<1x8xf32> to vector<8x8xf32>
    %366 = arith.addf %361, %365 : vector<8x8xf32>
    %cst_137 = arith.constant dense<0xFF800000> : vector<8xf32>
    %367 = vector.multi_reduction <maximumf>, %366, %cst_137 [1] : vector<8x8xf32> to vector<8xf32>
    %368 = vector.shape_cast %367 : vector<8xf32> to vector<8x1xf32>
    %369 = vector.broadcast %368 : vector<8x1xf32> to vector<8x8xf32>
    %370 = arith.subf %366, %369 : vector<8x8xf32>
    %371 = math.exp %370 : vector<8x8xf32>
    %cst_138 = arith.constant dense<0.000000e+00> : vector<8xf32>
    %372 = vector.multi_reduction <add>, %371, %cst_138 [1] : vector<8x8xf32> to vector<8xf32>
    %373 = vector.shape_cast %372 : vector<8xf32> to vector<8x1xf32>
    %374 = tpu.reciprocal %373 {approx = true} : vector<8x1xf32> -> vector<8x1xf32>
    %375 = vector.broadcast %374 : vector<8x1xf32> to vector<8x8xf32>
    %376 = arith.mulf %371, %375 : vector<8x8xf32>
    %cst_139 = arith.constant dense<0.000000e+00> : vector<8x8xf32>
    %377 = tpu.matmul %376, %358, %cst_139 {dimension_numbers = #tpu.dot_dimension_numbers<[1], [0], [0], [1], [0, 0, 1, 1], [], []>} : vector<8x8xf32>, vector<8x8xf32>, vector<8x8xf32> -> vector<8x8xf32>
    %c0_140 = arith.constant 0 : index
    %c16_141 = arith.constant 16 : index
    %378 = vector.load %arg9[%c0_140, %c16_141] : memref<16x32xf32, #tpu.memory_space<vmem>>, vector<8x8xf32>
    tpu.vector_store %arg9[%c0_140, %c16_141], %377 {strides = array<i32>} : memref<16x32xf32, #tpu.memory_space<vmem>>, vector<8x8xf32>,
    %379 = vector.extract_strided_slice %307 {offsets = [0, 24], sizes = [8, 8], strides = [1, 1]} : vector<16x96xf32> to vector<8x8xf32>
    %380 = vector.extract_strided_slice %307 {offsets = [0, 56], sizes = [8, 8], strides = [1, 1]} : vector<16x96xf32> to vector<8x8xf32>
    %381 = vector.extract_strided_slice %307 {offsets = [0, 88], sizes = [8, 8], strides = [1, 1]} : vector<16x96xf32> to vector<8x8xf32>
    %cst_142 = arith.constant dense<0.000000e+00> : vector<8x8xf32>
    %382 = tpu.matmul %379, %380, %cst_142 {dimension_numbers = #tpu.dot_dimension_numbers<[1], [1], [0], [0], [0, 0, 1, 0], [], []>} : vector<8x8xf32>, vector<8x8xf32>, vector<8x8xf32> -> vector<8x8xf32>
    %cst_143 = arith.constant 0.353553385 : f32
    %383 = vector.broadcast %cst_143 : f32 to vector<8x8xf32>
    %384 = arith.mulf %382, %383 : vector<8x8xf32>
    %cst_144 = arith.constant 3.906250e-03 : f32
    %385 = vector.broadcast %cst_144 : f32 to vector<1x8xf32>
    %386 = arith.mulf %385, %308 : vector<1x8xf32>
    %387 = arith.addf %386, %309 : vector<1x8xf32>
    %388 = vector.broadcast %387 : vector<1x8xf32> to vector<8x8xf32>
    %389 = arith.addf %384, %388 : vector<8x8xf32>
    %cst_145 = arith.constant dense<0xFF800000> : vector<8xf32>
    %390 = vector.multi_reduction <maximumf>, %389, %cst_145 [1] : vector<8x8xf32> to vector<8xf32>
    %391 = vector.shape_cast %390 : vector<8xf32> to vector<8x1xf32>
    %392 = vector.broadcast %391 : vector<8x1xf32> to vector<8x8xf32>
    %393 = arith.subf %389, %392 : vector<8x8xf32>
    %394 = math.exp %393 : vector<8x8xf32>
    %cst_146 = arith.constant dense<0.000000e+00> : vector<8xf32>
    %395 = vector.multi_reduction <add>, %394, %cst_146 [1] : vector<8x8xf32> to vector<8xf32>
    %396 = vector.shape_cast %395 : vector<8xf32> to vector<8x1xf32>
    %397 = tpu.reciprocal %396 {approx = true} : vector<8x1xf32> -> vector<8x1xf32>
    %398 = vector.broadcast %397 : vector<8x1xf32> to vector<8x8xf32>
    %399 = arith.mulf %394, %398 : vector<8x8xf32>
    %cst_147 = arith.constant dense<0.000000e+00> : vector<8x8xf32>
    %400 = tpu.matmul %399, %381, %cst_147 {dimension_numbers = #tpu.dot_dimension_numbers<[1], [0], [0], [1], [0, 0, 1, 1], [], []>} : vector<8x8xf32>, vector<8x8xf32>, vector<8x8xf32> -> vector<8x8xf32>
    %c0_148 = arith.constant 0 : index
    %c24_149 = arith.constant 24 : index
    %401 = vector.load %arg9[%c0_148, %c24_149] : memref<16x32xf32, #tpu.memory_space<vmem>>, vector<8x8xf32>
    tpu.vector_store %arg9[%c0_148, %c24_149], %400 {strides = array<i32>} : memref<16x32xf32, #tpu.memory_space<vmem>>, vector<8x8xf32>,
    %402 = vector.extract_strided_slice %25 {offsets = [1, 0], sizes = [1, 8], strides = [1, 1]} : vector<2x8xf32> to vector<1x8xf32>
    %403 = vector.extract_strided_slice %31 {offsets = [1, 0], sizes = [1, 8], strides = [1, 1]} : vector<2x8xf32> to vector<1x8xf32>
    %404 = vector.extract_strided_slice %307 {offsets = [8, 0], sizes = [8, 8], strides = [1, 1]} : vector<16x96xf32> to vector<8x8xf32>
    %405 = vector.extract_strided_slice %307 {offsets = [8, 32], sizes = [8, 8], strides = [1, 1]} : vector<16x96xf32> to vector<8x8xf32>
    %406 = vector.extract_strided_slice %307 {offsets = [8, 64], sizes = [8, 8], strides = [1, 1]} : vector<16x96xf32> to vector<8x8xf32>
    %cst_150 = arith.constant dense<0.000000e+00> : vector<8x8xf32>
    %407 = tpu.matmul %404, %405, %cst_150 {dimension_numbers = #tpu.dot_dimension_numbers<[1], [1], [0], [0], [0, 0, 1, 0], [], []>} : vector<8x8xf32>, vector<8x8xf32>, vector<8x8xf32> -> vector<8x8xf32>
    %cst_151 = arith.constant 0.353553385 : f32
    %408 = vector.broadcast %cst_151 : f32 to vector<8x8xf32>
    %409 = arith.mulf %407, %408 : vector<8x8xf32>
    %cst_152 = arith.constant 2.500000e-01 : f32
    %410 = vector.broadcast %cst_152 : f32 to vector<1x8xf32>
    %411 = arith.mulf %410, %402 : vector<1x8xf32>
    %412 = arith.addf %411, %403 : vector<1x8xf32>
    %413 = vector.broadcast %412 : vector<1x8xf32> to vector<8x8xf32>
    %414 = arith.addf %409, %413 : vector<8x8xf32>
    %cst_153 = arith.constant dense<0xFF800000> : vector<8xf32>
    %415 = vector.multi_reduction <maximumf>, %414, %cst_153 [1] : vector<8x8xf32> to vector<8xf32>
    %416 = vector.shape_cast %415 : vector<8xf32> to vector<8x1xf32>
    %417 = vector.broadcast %416 : vector<8x1xf32> to vector<8x8xf32>
    %418 = arith.subf %414, %417 : vector<8x8xf32>
    %419 = math.exp %418 : vector<8x8xf32>
    %cst_154 = arith.constant dense<0.000000e+00> : vector<8xf32>
    %420 = vector.multi_reduction <add>, %419, %cst_154 [1] : vector<8x8xf32> to vector<8xf32>
    %421 = vector.shape_cast %420 : vector<8xf32> to vector<8x1xf32>
    %422 = tpu.reciprocal %421 {approx = true} : vector<8x1xf32> -> vector<8x1xf32>
    %423 = vector.broadcast %422 : vector<8x1xf32> to vector<8x8xf32>
    %424 = arith.mulf %419, %423 : vector<8x8xf32>
    %cst_155 = arith.constant dense<0.000000e+00> : vector<8x8xf32>
    %425 = tpu.matmul %424, %406, %cst_155 {dimension_numbers = #tpu.dot_dimension_numbers<[1], [0], [0], [1], [0, 0, 1, 1], [], []>} : vector<8x8xf32>, vector<8x8xf32>, vector<8x8xf32> -> vector<8x8xf32>
    %c8_156 = arith.constant 8 : index
    %c0_157 = arith.constant 0 : index
    %426 = vector.load %arg9[%c8_156, %c0_157] : memref<16x32xf32, #tpu.memory_space<vmem>>, vector<8x8xf32>
    tpu.vector_store %arg9[%c8_156, %c0_157], %425 {strides = array<i32>} : memref<16x32xf32, #tpu.memory_space<vmem>>, vector<8x8xf32>,
    %427 = vector.extract_strided_slice %307 {offsets = [8, 8], sizes = [8, 8], strides = [1, 1]} : vector<16x96xf32> to vector<8x8xf32>
    %428 = vector.extract_strided_slice %307 {offsets = [8, 40], sizes = [8, 8], strides = [1, 1]} : vector<16x96xf32> to vector<8x8xf32>
    %429 = vector.extract_strided_slice %307 {offsets = [8, 72], sizes = [8, 8], strides = [1, 1]} : vector<16x96xf32> to vector<8x8xf32>
    %cst_158 = arith.constant dense<0.000000e+00> : vector<8x8xf32>
    %430 = tpu.matmul %427, %428, %cst_158 {dimension_numbers = #tpu.dot_dimension_numbers<[1], [1], [0], [0], [0, 0, 1, 0], [], []>} : vector<8x8xf32>, vector<8x8xf32>, vector<8x8xf32> -> vector<8x8xf32>
    %cst_159 = arith.constant 0.353553385 : f32
    %431 = vector.broadcast %cst_159 : f32 to vector<8x8xf32>
    %432 = arith.mulf %430, %431 : vector<8x8xf32>
    %cst_160 = arith.constant 6.250000e-02 : f32
    %433 = vector.broadcast %cst_160 : f32 to vector<1x8xf32>
    %434 = arith.mulf %433, %402 : vector<1x8xf32>
    %435 = arith.addf %434, %403 : vector<1x8xf32>
    %436 = vector.broadcast %435 : vector<1x8xf32> to vector<8x8xf32>
    %437 = arith.addf %432, %436 : vector<8x8xf32>
    %cst_161 = arith.constant dense<0xFF800000> : vector<8xf32>
    %438 = vector.multi_reduction <maximumf>, %437, %cst_161 [1] : vector<8x8xf32> to vector<8xf32>
    %439 = vector.shape_cast %438 : vector<8xf32> to vector<8x1xf32>
    %440 = vector.broadcast %439 : vector<8x1xf32> to vector<8x8xf32>
    %441 = arith.subf %437, %440 : vector<8x8xf32>
    %442 = math.exp %441 : vector<8x8xf32>
    %cst_162 = arith.constant dense<0.000000e+00> : vector<8xf32>
    %443 = vector.multi_reduction <add>, %442, %cst_162 [1] : vector<8x8xf32> to vector<8xf32>
    %444 = vector.shape_cast %443 : vector<8xf32> to vector<8x1xf32>
    %445 = tpu.reciprocal %444 {approx = true} : vector<8x1xf32> -> vector<8x1xf32>
    %446 = vector.broadcast %445 : vector<8x1xf32> to vector<8x8xf32>
    %447 = arith.mulf %442, %446 : vector<8x8xf32>
    %cst_163 = arith.constant dense<0.000000e+00> : vector<8x8xf32>
    %448 = tpu.matmul %447, %429, %cst_163 {dimension_numbers = #tpu.dot_dimension_numbers<[1], [0], [0], [1], [0, 0, 1, 1], [], []>} : vector<8x8xf32>, vector<8x8xf32>, vector<8x8xf32> -> vector<8x8xf32>
    %c8_164 = arith.constant 8 : index
    %c8_165 = arith.constant 8 : index
    %449 = vector.load %arg9[%c8_164, %c8_165] : memref<16x32xf32, #tpu.memory_space<vmem>>, vector<8x8xf32>
    tpu.vector_store %arg9[%c8_164, %c8_165], %448 {strides = array<i32>} : memref<16x32xf32, #tpu.memory_space<vmem>>, vector<8x8xf32>,
    %450 = vector.extract_strided_slice %307 {offsets = [8, 16], sizes = [8, 8], strides = [1, 1]} : vector<16x96xf32> to vector<8x8xf32>
    %451 = vector.extract_strided_slice %307 {offsets = [8, 48], sizes = [8, 8], strides = [1, 1]} : vector<16x96xf32> to vector<8x8xf32>
    %452 = vector.extract_strided_slice %307 {offsets = [8, 80], sizes = [8, 8], strides = [1, 1]} : vector<16x96xf32> to vector<8x8xf32>
    %cst_166 = arith.constant dense<0.000000e+00> : vector<8x8xf32>
    %453 = tpu.matmul %450, %451, %cst_166 {dimension_numbers = #tpu.dot_dimension_numbers<[1], [1], [0], [0], [0, 0, 1, 0], [], []>} : vector<8x8xf32>, vector<8x8xf32>, vector<8x8xf32> -> vector<8x8xf32>
    %cst_167 = arith.constant 0.353553385 : f32
    %454 = vector.broadcast %cst_167 : f32 to vector<8x8xf32>
    %455 = arith.mulf %453, %454 : vector<8x8xf32>
    %cst_168 = arith.constant 1.562500e-02 : f32
    %456 = vector.broadcast %cst_168 : f32 to vector<1x8xf32>
    %457 = arith.mulf %456, %402 : vector<1x8xf32>
    %458 = arith.addf %457, %403 : vector<1x8xf32>
    %459 = vector.broadcast %458 : vector<1x8xf32> to vector<8x8xf32>
    %460 = arith.addf %455, %459 : vector<8x8xf32>
    %cst_169 = arith.constant dense<0xFF800000> : vector<8xf32>
    %461 = vector.multi_reduction <maximumf>, %460, %cst_169 [1] : vector<8x8xf32> to vector<8xf32>
    %462 = vector.shape_cast %461 : vector<8xf32> to vector<8x1xf32>
    %463 = vector.broadcast %462 : vector<8x1xf32> to vector<8x8xf32>
    %464 = arith.subf %460, %463 : vector<8x8xf32>
    %465 = math.exp %464 : vector<8x8xf32>
    %cst_170 = arith.constant dense<0.000000e+00> : vector<8xf32>
    %466 = vector.multi_reduction <add>, %465, %cst_170 [1] : vector<8x8xf32> to vector<8xf32>
    %467 = vector.shape_cast %466 : vector<8xf32> to vector<8x1xf32>
    %468 = tpu.reciprocal %467 {approx = true} : vector<8x1xf32> -> vector<8x1xf32>
    %469 = vector.broadcast %468 : vector<8x1xf32> to vector<8x8xf32>
    %470 = arith.mulf %465, %469 : vector<8x8xf32>
    %cst_171 = arith.constant dense<0.000000e+00> : vector<8x8xf32>
    %471 = tpu.matmul %470, %452, %cst_171 {dimension_numbers = #tpu.dot_dimension_numbers<[1], [0], [0], [1], [0, 0, 1, 1], [], []>} : vector<8x8xf32>, vector<8x8xf32>, vector<8x8xf32> -> vector<8x8xf32>
    %c8_172 = arith.constant 8 : index
    %c16_173 = arith.constant 16 : index
    %472 = vector.load %arg9[%c8_172, %c16_173] : memref<16x32xf32, #tpu.memory_space<vmem>>, vector<8x8xf32>
    tpu.vector_store %arg9[%c8_172, %c16_173], %471 {strides = array<i32>} : memref<16x32xf32, #tpu.memory_space<vmem>>, vector<8x8xf32>,
    %473 = vector.extract_strided_slice %307 {offsets = [8, 24], sizes = [8, 8], strides = [1, 1]} : vector<16x96xf32> to vector<8x8xf32>
    %474 = vector.extract_strided_slice %307 {offsets = [8, 56], sizes = [8, 8], strides = [1, 1]} : vector<16x96xf32> to vector<8x8xf32>
    %475 = vector.extract_strided_slice %307 {offsets = [8, 88], sizes = [8, 8], strides = [1, 1]} : vector<16x96xf32> to vector<8x8xf32>
    %cst_174 = arith.constant dense<0.000000e+00> : vector<8x8xf32>
    %476 = tpu.matmul %473, %474, %cst_174 {dimension_numbers = #tpu.dot_dimension_numbers<[1], [1], [0], [0], [0, 0, 1, 0], [], []>} : vector<8x8xf32>, vector<8x8xf32>, vector<8x8xf32> -> vector<8x8xf32>
    %cst_175 = arith.constant 0.353553385 : f32
    %477 = vector.broadcast %cst_175 : f32 to vector<8x8xf32>
    %478 = arith.mulf %476, %477 : vector<8x8xf32>
    %cst_176 = arith.constant 3.906250e-03 : f32
    %479 = vector.broadcast %cst_176 : f32 to vector<1x8xf32>
    %480 = arith.mulf %479, %402 : vector<1x8xf32>
    %481 = arith.addf %480, %403 : vector<1x8xf32>
    %482 = vector.broadcast %481 : vector<1x8xf32> to vector<8x8xf32>
    %483 = arith.addf %478, %482 : vector<8x8xf32>
    %cst_177 = arith.constant dense<0xFF800000> : vector<8xf32>
    %484 = vector.multi_reduction <maximumf>, %483, %cst_177 [1] : vector<8x8xf32> to vector<8xf32>
    %485 = vector.shape_cast %484 : vector<8xf32> to vector<8x1xf32>
    %486 = vector.broadcast %485 : vector<8x1xf32> to vector<8x8xf32>
    %487 = arith.subf %483, %486 : vector<8x8xf32>
    %488 = math.exp %487 : vector<8x8xf32>
    %cst_178 = arith.constant dense<0.000000e+00> : vector<8xf32>
    %489 = vector.multi_reduction <add>, %488, %cst_178 [1] : vector<8x8xf32> to vector<8xf32>
    %490 = vector.shape_cast %489 : vector<8xf32> to vector<8x1xf32>
    %491 = tpu.reciprocal %490 {approx = true} : vector<8x1xf32> -> vector<8x1xf32>
    %492 = vector.broadcast %491 : vector<8x1xf32> to vector<8x8xf32>
    %493 = arith.mulf %488, %492 : vector<8x8xf32>
    %cst_179 = arith.constant dense<0.000000e+00> : vector<8x8xf32>
    %494 = tpu.matmul %493, %475, %cst_179 {dimension_numbers = #tpu.dot_dimension_numbers<[1], [0], [0], [1], [0, 0, 1, 1], [], []>} : vector<8x8xf32>, vector<8x8xf32>, vector<8x8xf32> -> vector<8x8xf32>
    %c8_180 = arith.constant 8 : index
    %c24_181 = arith.constant 24 : index
    %495 = vector.load %arg9[%c8_180, %c24_181] : memref<16x32xf32, #tpu.memory_space<vmem>>, vector<8x8xf32>
    tpu.vector_store %arg9[%c8_180, %c24_181], %494 {strides = array<i32>} : memref<16x32xf32, #tpu.memory_space<vmem>>, vector<8x8xf32>,
    %c0_182 = arith.constant 0 : index
    %c0_183 = arith.constant 0 : index
    %496 = vector.load %arg9[%c0_182, %c0_183] : memref<16x32xf32, #tpu.memory_space<vmem>>, vector<16x32xf32>
    %497 = arith.truncf %496 : vector<16x32xf32> to vector<16x32xbf16>
    %c1_184 = arith.constant 1 : index
    %c0_185 = arith.constant 0 : index
    %c0_186 = arith.constant 0 : index
    %498 = vector.load %arg4[%c1_184, %c0_185, %c0_186] : memref<2x32x32xbf16, #tpu.memory_space<vmem>>, vector<1x32x32xbf16>
    %499 = vector.shape_cast %498 : vector<1x32x32xbf16> to vector<32x32xbf16>
    %cst_187 = arith.constant dense<0.000000e+00> : vector<16x32xf32>
    %500 = tpu.matmul %497, %499, %cst_187 {dimension_numbers = #tpu.dot_dimension_numbers<[1], [0], [0], [1], [0, 0, 1, 1], [], []>} : vector<16x32xbf16>, vector<32x32xbf16>, vector<16x32xf32> -> vector<16x32xf32>
    %c11 = arith.constant 11 : index
    %c0_188 = arith.constant 0 : index
    %501 = vector.load %arg7[%c11, %c0_188] : memref<18x128xf32, #tpu.memory_space<vmem>>, vector<1x32xf32>
    %502 = vector.broadcast %501 : vector<1x32xf32> to vector<16x32xf32>
    %503 = arith.addf %500, %502 : vector<16x32xf32>
    %504 = arith.addf %300, %503 : vector<16x32xf32>
    %c12 = arith.constant 12 : index
    %c0_189 = arith.constant 0 : index
    %505 = vector.load %arg7[%c12, %c0_189] : memref<18x128xf32, #tpu.memory_space<vmem>>, vector<1x32xf32>
    %c13 = arith.constant 13 : index
    %c0_190 = arith.constant 0 : index
    %506 = vector.load %arg7[%c13, %c0_190] : memref<18x128xf32, #tpu.memory_space<vmem>>, vector<1x32xf32>
    %cst_191 = arith.constant dense<0.000000e+00> : vector<16xf32>
    %507 = vector.multi_reduction <add>, %504, %cst_191 [1] : vector<16x32xf32> to vector<16xf32>
    %508 = vector.shape_cast %507 : vector<16xf32> to vector<16x1xf32>
    %cst_192 = arith.constant 3.200000e+01 : f32
    %509 = vector.broadcast %cst_192 : f32 to vector<16x1xf32>
    %510 = arith.divf %508, %509 : vector<16x1xf32>
    %511 = vector.broadcast %510 : vector<16x1xf32> to vector<16x32xf32>
    %512 = arith.subf %504, %511 : vector<16x32xf32>
    %513 = arith.mulf %512, %512 : vector<16x32xf32>
    %cst_193 = arith.constant dense<0.000000e+00> : vector<16xf32>
    %514 = vector.multi_reduction <add>, %513, %cst_193 [1] : vector<16x32xf32> to vector<16xf32>
    %515 = vector.shape_cast %514 : vector<16xf32> to vector<16x1xf32>
    %cst_194 = arith.constant 3.200000e+01 : f32
    %516 = vector.broadcast %cst_194 : f32 to vector<16x1xf32>
    %517 = arith.divf %515, %516 : vector<16x1xf32>
    %518 = vector.broadcast %510 : vector<16x1xf32> to vector<16x32xf32>
    %519 = arith.subf %504, %518 : vector<16x32xf32>
    %cst_195 = arith.constant 9.99999974E-6 : f32
    %520 = vector.broadcast %cst_195 : f32 to vector<16x1xf32>
    %521 = arith.addf %517, %520 : vector<16x1xf32>
    %522 = math.rsqrt %521 : vector<16x1xf32>
    %523 = vector.broadcast %522 : vector<16x1xf32> to vector<16x32xf32>
    %524 = arith.mulf %519, %523 : vector<16x32xf32>
    %525 = vector.broadcast %505 : vector<1x32xf32> to vector<16x32xf32>
    %526 = arith.mulf %524, %525 : vector<16x32xf32>
    %527 = vector.broadcast %506 : vector<1x32xf32> to vector<16x32xf32>
    %528 = arith.addf %526, %527 : vector<16x32xf32>
    %529 = arith.truncf %528 : vector<16x32xf32> to vector<16x32xbf16>
    %c1_196 = arith.constant 1 : index
    %c0_197 = arith.constant 0 : index
    %c0_198 = arith.constant 0 : index
    %530 = vector.load %arg5[%c1_196, %c0_197, %c0_198] : memref<2x32x128xbf16, #tpu.memory_space<vmem>>, vector<1x32x128xbf16>
    %531 = vector.shape_cast %530 : vector<1x32x128xbf16> to vector<32x128xbf16>
    %cst_199 = arith.constant dense<0.000000e+00> : vector<16x128xf32>
    %532 = tpu.matmul %529, %531, %cst_199 {dimension_numbers = #tpu.dot_dimension_numbers<[1], [0], [0], [1], [0, 0, 1, 1], [], []>} : vector<16x32xbf16>, vector<32x128xbf16>, vector<16x128xf32> -> vector<16x128xf32>
    %c16_200 = arith.constant 16 : index
    %c0_201 = arith.constant 0 : index
    %533 = vector.load %arg7[%c16_200, %c0_201] : memref<18x128xf32, #tpu.memory_space<vmem>>, vector<1x128xf32>
    %534 = vector.broadcast %533 : vector<1x128xf32> to vector<16x128xf32>
    %535 = arith.addf %532, %534 : vector<16x128xf32>
    %cst_202 = arith.constant 0.000000e+00 : f32
    %536 = vector.broadcast %cst_202 : f32 to vector<16x128xf32>
    %537 = arith.maximumf %535, %536 : vector<16x128xf32>
    %538 = arith.truncf %537 : vector<16x128xf32> to vector<16x128xbf16>
    %c1_203 = arith.constant 1 : index
    %c0_204 = arith.constant 0 : index
    %c0_205 = arith.constant 0 : index
    %539 = vector.load %arg6[%c1_203, %c0_204, %c0_205] : memref<2x128x32xbf16, #tpu.memory_space<vmem>>, vector<1x128x32xbf16>
    %540 = vector.shape_cast %539 : vector<1x128x32xbf16> to vector<128x32xbf16>
    %cst_206 = arith.constant dense<0.000000e+00> : vector<16x32xf32>
    %541 = tpu.matmul %538, %540, %cst_206 {dimension_numbers = #tpu.dot_dimension_numbers<[1], [0], [0], [1], [0, 0, 1, 1], [], []>} : vector<16x128xbf16>, vector<128x32xbf16>, vector<16x32xf32> -> vector<16x32xf32>
    %c17 = arith.constant 17 : index
    %c0_207 = arith.constant 0 : index
    %542 = vector.load %arg7[%c17, %c0_207] : memref<18x128xf32, #tpu.memory_space<vmem>>, vector<1x32xf32>
    %543 = vector.broadcast %542 : vector<1x32xf32> to vector<16x32xf32>
    %544 = arith.addf %541, %543 : vector<16x32xf32>
    %545 = arith.addf %528, %544 : vector<16x32xf32>
    %c14 = arith.constant 14 : index
    %c0_208 = arith.constant 0 : index
    %546 = vector.load %arg7[%c14, %c0_208] : memref<18x128xf32, #tpu.memory_space<vmem>>, vector<1x32xf32>
    %c15 = arith.constant 15 : index
    %c0_209 = arith.constant 0 : index
    %547 = vector.load %arg7[%c15, %c0_209] : memref<18x128xf32, #tpu.memory_space<vmem>>, vector<1x32xf32>
    %cst_210 = arith.constant dense<0.000000e+00> : vector<16xf32>
    %548 = vector.multi_reduction <add>, %545, %cst_210 [1] : vector<16x32xf32> to vector<16xf32>
    %549 = vector.shape_cast %548 : vector<16xf32> to vector<16x1xf32>
    %cst_211 = arith.constant 3.200000e+01 : f32
    %550 = vector.broadcast %cst_211 : f32 to vector<16x1xf32>
    %551 = arith.divf %549, %550 : vector<16x1xf32>
    %552 = vector.broadcast %551 : vector<16x1xf32> to vector<16x32xf32>
    %553 = arith.subf %545, %552 : vector<16x32xf32>
    %554 = arith.mulf %553, %553 : vector<16x32xf32>
    %cst_212 = arith.constant dense<0.000000e+00> : vector<16xf32>
    %555 = vector.multi_reduction <add>, %554, %cst_212 [1] : vector<16x32xf32> to vector<16xf32>
    %556 = vector.shape_cast %555 : vector<16xf32> to vector<16x1xf32>
    %cst_213 = arith.constant 3.200000e+01 : f32
    %557 = vector.broadcast %cst_213 : f32 to vector<16x1xf32>
    %558 = arith.divf %556, %557 : vector<16x1xf32>
    %559 = vector.broadcast %551 : vector<16x1xf32> to vector<16x32xf32>
    %560 = arith.subf %545, %559 : vector<16x32xf32>
    %cst_214 = arith.constant 9.99999974E-6 : f32
    %561 = vector.broadcast %cst_214 : f32 to vector<16x1xf32>
    %562 = arith.addf %558, %561 : vector<16x1xf32>
    %563 = math.rsqrt %562 : vector<16x1xf32>
    %564 = vector.broadcast %563 : vector<16x1xf32> to vector<16x32xf32>
    %565 = arith.mulf %560, %564 : vector<16x32xf32>
    %566 = vector.broadcast %546 : vector<1x32xf32> to vector<16x32xf32>
    %567 = arith.mulf %565, %566 : vector<16x32xf32>
    %568 = vector.broadcast %547 : vector<1x32xf32> to vector<16x32xf32>
    %569 = arith.addf %567, %568 : vector<16x32xf32>
    %c0_215 = arith.constant 0 : index
    %c0_216 = arith.constant 0 : index
    %570 = vector.load %arg8[%c0_215, %c0_216] : memref<16x32xf32, #tpu.memory_space<vmem>>, vector<16x32xf32>
    tpu.vector_store %arg8[%c0_215, %c0_216], %569 {strides = array<i32>} : memref<16x32xf32, #tpu.memory_space<vmem>>, vector<16x32xf32>,
    return
  }
}

</mosaic_0001>

<llo_original>
// kernel: tpu_custom_call.1
$region0: #{tpu_custom_call.1}
  #allocation0 [shape = 'u32[]', space=smem, size = 0x4, offset = 0x4, fixed_abs, tag = 'smem constant byte address 0x4 - core index']
  #allocation1 [shape = 'u32[72,128]{1,0:T(1,128)}', space=vmem, size = 0x9000, scoped, tag = 'internal scratch']
  #allocation2 [shape = 'f32[16,32]{1,0:T(8,128)}', space=vmem, size = 0x2000, scoped, tag = 'scratch operand']
  %s0 = inlined_call_operand.vmem [shape: f32[16,32], index: 0, kind: input, shape index: {}]
  %s1 = inlined_call_operand.vmem [shape: f32[2,8], index: 1, kind: input, shape index: {}]
  %s2 = inlined_call_operand.vmem [shape: s32[2,8], index: 2, kind: input, shape index: {}]
  %s3 = inlined_call_operand.vmem [shape: bf16[2,32,96], index: 3, kind: input, shape index: {}]
  %s4 = inlined_call_operand.vmem [shape: bf16[2,32,32], index: 4, kind: input, shape index: {}]
  %s5 = inlined_call_operand.vmem [shape: bf16[2,32,128], index: 5, kind: input, shape index: {}]
  %s6 = inlined_call_operand.vmem [shape: bf16[2,128,32], index: 6, kind: input, shape index: {}]
  %s7 = inlined_call_operand.vmem [shape: f32[18,128], index: 7, kind: input, shape index: {}]
  %s8 = inlined_call_operand.hbm [shape: f32[16,32], index: 8, kind: output, shape index: {}]
  %s9 = sld [smem:[#allocation0]]
  $region42: #{tpu_custom_call.1} parent=0
    _
  %s11 = ssub.s32 1, %s9
  %s12 = scalar_select 0, %s11, %s9
  $region1: #{tpu_custom_call.1} parent=0
    #allocation3 [shape = 'u8[8192]{0}', space=vmem, size = 0x2000, scoped, tag = 'output window, operand 0, single buffered']
    #allocation4 [shape = 's32[1]{0}', space=sflag, size = 0x4, scoped, tag = 'scoped memory for tpu_custom_call.1']
    %13 = vsyncpa [#allocation4], 0
    // Predicated region
    $region2: #{tpu_custom_call.1} parent=1 // pred_check
      _
    $region3: #{tpu_custom_call.1} parent=1 // pred_check_branch
      %15 = sbr.rel (0) target = $region5
    $region4: #{tpu_custom_call.1} parent=1 // pred_region
      _
    $region5: #{tpu_custom_call.1} parent=1 // pred_fallthru
      _
    // Predicated region
    $region6: #{tpu_custom_call.1} parent=1 // pred_check
      _
    $region7: #{tpu_custom_call.1} parent=1 // pred_check_branch
      %17 = sbr.rel (0) target = $region9
    $region8: #{tpu_custom_call.1} parent=1 // pred_region
      _
    $region9: #{tpu_custom_call.1} parent=1 // pred_fallthru
      _
    // Predicated region
    $region10: #{tpu_custom_call.1} parent=1 // pred_check
      _
    $region11: #{tpu_custom_call.1} parent=1 // pred_check_branch
      %19 = sbr.rel (0) target = $region13
    $region12: #{tpu_custom_call.1} parent=1 // pred_region
      _
    $region13: #{tpu_custom_call.1} parent=1 // pred_fallthru
      _
    // Predicated region
    $region14: #{tpu_custom_call.1} parent=1 // pred_check
      _
    $region15: #{tpu_custom_call.1} parent=1 // pred_check_branch
      %21 = sbr.rel (0) target = $region17
    $region16: #{tpu_custom_call.1} parent=1 // pred_region
      _
    $region17: #{tpu_custom_call.1} parent=1 // pred_fallthru
      _
    // Predicated region
    $region18: #{tpu_custom_call.1} parent=1 // pred_check
      _
    $region19: #{tpu_custom_call.1} parent=1 // pred_check_branch
      %23 = sbr.rel (0) target = $region21
    $region20: #{tpu_custom_call.1} parent=1 // pred_region
      _
    $region21: #{tpu_custom_call.1} parent=1 // pred_fallthru
      _
    // Predicated region
    $region22: #{tpu_custom_call.1} parent=1 // pred_check
      _
    $region23: #{tpu_custom_call.1} parent=1 // pred_check_branch
      %25 = sbr.rel (0) target = $region25
    $region24: #{tpu_custom_call.1} parent=1 // pred_region
      _
    $region25: #{tpu_custom_call.1} parent=1 // pred_fallthru
      _
    // Predicated region
    $region26: #{tpu_custom_call.1} parent=1 // pred_check
      _
    $region27: #{tpu_custom_call.1} parent=1 // pred_check_branch
      %27 = sbr.rel (0) target = $region29
    $region28: #{tpu_custom_call.1} parent=1 // pred_region
      _
    $region29: #{tpu_custom_call.1} parent=1 // pred_fallthru
      _
    // Predicated region
    $region30: #{tpu_custom_call.1} parent=1 // pred_check
      _
    $region31: #{tpu_custom_call.1} parent=1 // pred_check_branch
      %29 = sbr.rel (0) target = $region33
    $region32: #{tpu_custom_call.1} parent=1 // pred_region
      _
    $region33: #{tpu_custom_call.1} parent=1 // pred_fallthru
      _
    %v31 = vld [vmem:[%s0] sm:$0xff]
    %v32 = vld [vmem:[%s0 + $0x8] sm:$0xff]
    %v33 = vld [vmem:[%s7] sm:$0x1]
    %v34 = vld [vmem:[%s7 + $0x1] sm:$0x1]
    %vm35 = vcmask 261120
    %v36 = vsel %vm35, %v31, 0.0
    %37 = vadd.xlane.f32.xlu0 %v36
    %v38 = vpop.xlane.xlu0 %37
    %v39 = vsel %vm35, %v32, 0.0
    %40 = vadd.xlane.f32.xlu0 %v39
    %v41 = vpop.xlane.xlu0 %40
    %v42 = vrcp.pop 32.0
    %v43 = vmul.f32 32.0, %v42
    %v44 = vsub.f32 1.0, %v43
    %v45 = vmul.f32 %v42, %v44
    %v46 = vadd.f32 %v42, %v45
    %vm47 = vweird.f32 %v42
    %v48 = vsel %vm47, %v42, %v46
    %v49 = vmul.f32 %v38, %v48
    %v50 = vmul.f32 %v41, %v48
    %v51 = vsub.f32 %v31, %v49
    %v52 = vsub.f32 %v32, %v50
    %v53 = vmul.f32 %v51, %v51
    %v54 = vmul.f32 %v52, %v52
    %v55 = vsel %vm35, %v53, 0.0
    %56 = vadd.xlane.f32.xlu0 %v55
    %v57 = vpop.xlane.xlu0 %56
    %v58 = vsel %vm35, %v54, 0.0
    %59 = vadd.xlane.f32.xlu0 %v58
    %v60 = vpop.xlane.xlu0 %59
    %v61 = vmul.f32 %v57, %v48
    %v62 = vmul.f32 %v60, %v48
    %v63 = vadd.f32 %v61, 1e-12
    %v64 = vadd.f32 %v62, 1e-12
    %v65 = vrsqrt.pop %v63
    %v66 = vmul.f32 %v65, %v63
    %v67 = vmul.f32 %v66, %v65
    %v68 = vmul.f32 0.5, %v67
    %v69 = vsub.f32 1.5, %v68
    %v70 = vmul.f32 %v65, %v69
    %vm71 = vweird.f32 %v63
    %vm72 = vweird.f32 %v65
    %vm73 = vmor %vm71, %vm72
    %v74 = vsel %vm73, %v65, %v70
    %v75 = vrsqrt.pop %v64
    %v76 = vmul.f32 %v75, %v64
    %v77 = vmul.f32 %v76, %v75
    %v78 = vmul.f32 0.5, %v77
    %v79 = vsub.f32 1.5, %v78
    %v80 = vmul.f32 %v75, %v79
    %vm81 = vweird.f32 %v64
    %vm82 = vweird.f32 %v75
    %vm83 = vmor %vm81, %vm82
    %v84 = vsel %vm83, %v75, %v80
    %v85 = vmul.f32 %v51, %v74
    %v86 = vmul.f32 %v52, %v84
    %v87 = vperm.slane %v33, 0
    %v88 = vmul.f32 %v85, %v87
    %v89 = vmul.f32 %v86, %v87
    %v90 = vperm.slane %v34, 0
    %v91 = vadd.f32 %v88, %v90
    %v92 = vadd.f32 %v89, %v90
    %v93 = vld [vmem:[%s1] sm:$0x3]
    %v94 = vld [vmem:[%s2] sm:$0x3]
    %vm95 = vcmp.eq.s32.totalorder %v94, 0
    %v96 = vsel %vm95, -1e+09, 0.0
    %v97 = vpack.c.bf16 %v92, %v91
    %v98 = vld [vmem:[%s3] sm:$0xf]
    %v99 = vld [vmem:[%s3 + $0x4] sm:$0xf]
    %v100 = vld [vmem:[%s3 + $0x8] sm:$0xf]
    %v101 = vld [vmem:[%s3 + $0xc] sm:$0xf]
    %v102 = vld [vmem:[%s7 + $0x2] sm:$0x1]
    %v103 = vperm.slane %v102, 0
    %v108 = vunpack.c.l.b16 %v98
    %v109 = vunpack.c.l.b16 %v99
    %v110 = vunpack.c.l.b16 %v100
    %v111 = vunpack.c.l.b16 %v101
    %v112 = vpack.c.b16 %v109, %v108
    %v113 = vpack.c.b16 %v111, %v110
    %v117 = vsel %vm35, %v97, 0
    %119 = vmatpush.bf16.msra.mxu0 0
    %120 = vmatpush.bf16.msra.mxu0 0
    %121 = vmatpush.bf16.msra.mxu0 0
    %122 = vmatpush.bf16.msra.mxu0 0
    %123 = vmatpush.bf16.msra.mxu0 0
    %124 = vmatpush.bf16.msra.mxu0 0
    %125 = vmatpush.bf16.msra.mxu0 %v113
    %126 = vmatpush.bf16.msra.mxu0 %v112
    %127 = vmatmul.bf16.gmra.mxu0 %v117
    %v128 = vpop.f32.mrf.mxu0
    %v129 = vadd.f32 %v103, %v128
    %v130 = vpop.f32.mrf.mxu0
    %v131 = vadd.f32 %v103, %v130
    %132 = vdwg.mxu0
    %134 = vrot.lane.b32.xlu0 %v129, 96
    %v135 = vpop.permute.xlu0 %134
    %vm136 = vcmask 64512
    %v137 = vsel %vm136, %v129, 0
    %v139 = vsel %vm136, %v135, 0
    %141 = vmatpush.xpose.msra.mxu0 0.0
    %142 = vmatpush.xpose.msra.mxu0 0.0
    %143 = vmatpush.xpose.msra.mxu0 0.0
    %144 = vmatpush.xpose.msra.mxu0 0.0
    %145 = vmatpush.xpose.msra.mxu0 0.0
    %146 = vmatpush.xpose.msra.mxu0 0.0
    %147 = vmatpush.xpose.msra.mxu0 0.0
    %148 = vmatpush.xpose.msra.mxu0 0.0
    %149 = vmatpush.xpose.msra.mxu0 0.0
    %150 = vmatpush.xpose.msra.mxu0 0.0
    %151 = vmatpush.xpose.msra.mxu0 0.0
    %152 = vmatpush.xpose.msra.mxu0 0.0
    %153 = vmatpush.xpose.msra.mxu0 0.0
    %154 = vmatpush.xpose.msra.mxu0 0.0
    %155 = vmatpush.xpose.msra.mxu0 0.0
    %156 = vmatpush.xpose.msra.mxu0 %v139
    %157 = vmatmul.f32.gmra.mxu0 %v137
    %v158 = vpop.f32.mrf.mxu0
    %v159 = vadd.f32 0.0, %v158
    %160 = vdwg.mxu0
    %v161 = vmul.f32 %v159, 0.35355338
    %v162 = vmul.f32 %v93, 0.25
    %v163 = vadd.f32 %v162, %v96
    %v164 = vperm.slane %v163, 0
    %v165 = vadd.f32 %v161, %v164
    %v166 = vsel %vm136, %v165, -inf
    %167 = vmax.xlane.f32.xlu0 %v166
    %v168 = vpop.xlane.xlu0 %167
    %v169 = vsub.f32 %v165, %v168
    %v170 = vmul.f32 %v169, 1.442695
    %v171 = vpow.pop %v170
    %v172 = vsel %vm136, %v171, 0.0
    %173 = vadd.xlane.f32.xlu0 %v172
    %v174 = vpop.xlane.xlu0 %173
    %v175 = vrcp.pop %v174
    %v176 = vmul.f32 %v171, %v175
    %177 = vrot.lane.b32.xlu0 %v129, 64
    %v178 = vpop.permute.xlu0 %177
    %v181 = vsel %vm136, %v176, 0
    %183 = vmatpush.msra.mxu0 0.0
    %184 = vmatpush.msra.mxu0 0.0
    %185 = vmatpush.msra.mxu0 0.0
    %186 = vmatpush.msra.mxu0 0.0
    %187 = vmatpush.msra.mxu0 0.0
    %188 = vmatpush.msra.mxu0 0.0
    %189 = vmatpush.msra.mxu0 0.0
    %190 = vmatpush.msra.mxu0 0.0
    %191 = vmatpush.msra.mxu0 0.0
    %192 = vmatpush.msra.mxu0 0.0
    %193 = vmatpush.msra.mxu0 0.0
    %194 = vmatpush.msra.mxu0 0.0
    %195 = vmatpush.msra.mxu0 0.0
    %196 = vmatpush.msra.mxu0 0.0
    %197 = vmatpush.msra.mxu0 0.0
    %198 = vmatpush.msra.mxu0 %v178
    %199 = vmatmul.f32.gmra.mxu0 %v181
    %v200 = vpop.f32.mrf.mxu0
    %v201 = vadd.f32 0.0, %v200
    %202 = vdwg.mxu0
    %203 = vst.msk [vmem:[#allocation2] sm:$0xff] %vm136, %v201
    %204 = vrot.lane.b32.xlu0 %v129, 120
    %v205 = vpop.permute.xlu0 %204
    %206 = vrot.lane.b32.xlu0 %v129, 88
    %v207 = vpop.permute.xlu0 %206
    %v208 = vsel %vm136, %v205, 0
    %v210 = vsel %vm136, %v207, 0
    %212 = vmatpush.xpose.msra.mxu0 0.0
    %213 = vmatpush.xpose.msra.mxu0 0.0
    %214 = vmatpush.xpose.msra.mxu0 0.0
    %215 = vmatpush.xpose.msra.mxu0 0.0
    %216 = vmatpush.xpose.msra.mxu0 0.0
    %217 = vmatpush.xpose.msra.mxu0 0.0
    %218 = vmatpush.xpose.msra.mxu0 0.0
    %219 = vmatpush.xpose.msra.mxu0 0.0
    %220 = vmatpush.xpose.msra.mxu0 0.0
    %221 = vmatpush.xpose.msra.mxu0 0.0
    %222 = vmatpush.xpose.msra.mxu0 0.0
    %223 = vmatpush.xpose.msra.mxu0 0.0
    %224 = vmatpush.xpose.msra.mxu0 0.0
    %225 = vmatpush.xpose.msra.mxu0 0.0
    %226 = vmatpush.xpose.msra.mxu0 0.0
    %227 = vmatpush.xpose.msra.mxu0 %v210
    %228 = vmatmul.f32.gmra.mxu0 %v208
    %v229 = vpop.f32.mrf.mxu0
    %v230 = vadd.f32 0.0, %v229
    %231 = vdwg.mxu0
    %v232 = vmul.f32 %v230, 0.35355338
    %v233 = vmul.f32 %v93, 0.0625
    %v234 = vadd.f32 %v233, %v96
    %v235 = vperm.slane %v234, 0
    %v236 = vadd.f32 %v232, %v235
    %v237 = vsel %vm136, %v236, -inf
    %238 = vmax.xlane.f32.xlu0 %v237
    %v239 = vpop.xlane.xlu0 %238
    %v240 = vsub.f32 %v236, %v239
    %v241 = vmul.f32 %v240, 1.442695
    %v242 = vpow.pop %v241
    %v243 = vsel %vm136, %v242, 0.0
    %244 = vadd.xlane.f32.xlu0 %v243
    %v245 = vpop.xlane.xlu0 %244
    %v246 = vrcp.pop %v245
    %v247 = vmul.f32 %v242, %v246
    %248 = vrot.lane.b32.xlu0 %v129, 56
    %v249 = vpop.permute.xlu0 %248
    %v252 = vsel %vm136, %v247, 0
    %254 = vmatpush.msra.mxu0 0.0
    %255 = vmatpush.msra.mxu0 0.0
    %256 = vmatpush.msra.mxu0 0.0
    %257 = vmatpush.msra.mxu0 0.0
    %258 = vmatpush.msra.mxu0 0.0
    %259 = vmatpush.msra.mxu0 0.0
    %260 = vmatpush.msra.mxu0 0.0
    %261 = vmatpush.msra.mxu0 0.0
    %262 = vmatpush.msra.mxu0 0.0
    %263 = vmatpush.msra.mxu0 0.0
    %264 = vmatpush.msra.mxu0 0.0
    %265 = vmatpush.msra.mxu0 0.0
    %266 = vmatpush.msra.mxu0 0.0
    %267 = vmatpush.msra.mxu0 0.0
    %268 = vmatpush.msra.mxu0 0.0
    %269 = vmatpush.msra.mxu0 %v249
    %270 = vmatmul.f32.gmra.mxu0 %v252
    %v271 = vpop.f32.mrf.mxu0
    %v272 = vadd.f32 0.0, %v271
    %273 = vdwg.mxu0
    %275 = vrot.lane.b32.xlu0 %v272, 8
    %v276 = vpop.permute.xlu0 %275
    %vm278 = vcmask 130112
    %279 = vst.msk [vmem:[#allocation2] sm:$0xff] %vm278, %v276
    %280 = vrot.lane.b32.xlu0 %v129, 112
    %v281 = vpop.permute.xlu0 %280
    %282 = vrot.lane.b32.xlu0 %v129, 80
    %v283 = vpop.permute.xlu0 %282
    %v284 = vsel %vm136, %v281, 0
    %v286 = vsel %vm136, %v283, 0
    %288 = vmatpush.xpose.msra.mxu0 0.0
    %289 = vmatpush.xpose.msra.mxu0 0.0
    %290 = vmatpush.xpose.msra.mxu0 0.0
    %291 = vmatpush.xpose.msra.mxu0 0.0
    %292 = vmatpush.xpose.msra.mxu0 0.0
    %293 = vmatpush.xpose.msra.mxu0 0.0
    %294 = vmatpush.xpose.msra.mxu0 0.0
    %295 = vmatpush.xpose.msra.mxu0 0.0
    %296 = vmatpush.xpose.msra.mxu0 0.0
    %297 = vmatpush.xpose.msra.mxu0 0.0
    %298 = vmatpush.xpose.msra.mxu0 0.0
    %299 = vmatpush.xpose.msra.mxu0 0.0
    %300 = vmatpush.xpose.msra.mxu0 0.0
    %301 = vmatpush.xpose.msra.mxu0 0.0
    %302 = vmatpush.xpose.msra.mxu0 0.0
    %303 = vmatpush.xpose.msra.mxu0 %v286
    %304 = vmatmul.f32.gmra.mxu0 %v284
    %v305 = vpop.f32.mrf.mxu0
    %v306 = vadd.f32 0.0, %v305
    %307 = vdwg.mxu0
    %v308 = vmul.f32 %v306, 0.35355338
    %v309 = vmul.f32 %v93, 0.015625
    %v310 = vadd.f32 %v309, %v96
    %v311 = vperm.slane %v310, 0
    %v312 = vadd.f32 %v308, %v311
    %v313 = vsel %vm136, %v312, -inf
    %314 = vmax.xlane.f32.xlu0 %v313
    %v315 = vpop.xlane.xlu0 %314
    %v316 = vsub.f32 %v312, %v315
    %v317 = vmul.f32 %v316, 1.442695
    %v318 = vpow.pop %v317
    %v319 = vsel %vm136, %v318, 0.0
    %320 = vadd.xlane.f32.xlu0 %v319
    %v321 = vpop.xlane.xlu0 %320
    %v322 = vrcp.pop %v321
    %v323 = vmul.f32 %v318, %v322
    %324 = vrot.lane.b32.xlu0 %v129, 48
    %v325 = vpop.permute.xlu0 %324
    %v328 = vsel %vm136, %v323, 0
    %330 = vmatpush.msra.mxu0 0.0
    %331 = vmatpush.msra.mxu0 0.0
    %332 = vmatpush.msra.mxu0 0.0
    %333 = vmatpush.msra.mxu0 0.0
    %334 = vmatpush.msra.mxu0 0.0
    %335 = vmatpush.msra.mxu0 0.0
    %336 = vmatpush.msra.mxu0 0.0
    %337 = vmatpush.msra.mxu0 0.0
    %338 = vmatpush.msra.mxu0 0.0
    %339 = vmatpush.msra.mxu0 0.0
    %340 = vmatpush.msra.mxu0 0.0
    %341 = vmatpush.msra.mxu0 0.0
    %342 = vmatpush.msra.mxu0 0.0
    %343 = vmatpush.msra.mxu0 0.0
    %344 = vmatpush.msra.mxu0 0.0
    %345 = vmatpush.msra.mxu0 %v325
    %346 = vmatmul.f32.gmra.mxu0 %v328
    %v347 = vpop.f32.mrf.mxu0
    %v348 = vadd.f32 0.0, %v347
    %349 = vdwg.mxu0
    %351 = vrot.lane.b32.xlu0 %v348, 16
    %v352 = vpop.permute.xlu0 %351
    %vm354 = vcmask 195712
    %355 = vst.msk [vmem:[#allocation2] sm:$0xff] %vm354, %v352
    %356 = vrot.lane.b32.xlu0 %v129, 104
    %v357 = vpop.permute.xlu0 %356
    %358 = vrot.lane.b32.xlu0 %v129, 72
    %v359 = vpop.permute.xlu0 %358
    %v360 = vsel %vm136, %v357, 0
    %v362 = vsel %vm136, %v359, 0
    %364 = vmatpush.xpose.msra.mxu0 0.0
    %365 = vmatpush.xpose.msra.mxu0 0.0
    %366 = vmatpush.xpose.msra.mxu0 0.0
    %367 = vmatpush.xpose.msra.mxu0 0.0
    %368 = vmatpush.xpose.msra.mxu0 0.0
    %369 = vmatpush.xpose.msra.mxu0 0.0
    %370 = vmatpush.xpose.msra.mxu0 0.0
    %371 = vmatpush.xpose.msra.mxu0 0.0
    %372 = vmatpush.xpose.msra.mxu0 0.0
    %373 = vmatpush.xpose.msra.mxu0 0.0
    %374 = vmatpush.xpose.msra.mxu0 0.0
    %375 = vmatpush.xpose.msra.mxu0 0.0
    %376 = vmatpush.xpose.msra.mxu0 0.0
    %377 = vmatpush.xpose.msra.mxu0 0.0
    %378 = vmatpush.xpose.msra.mxu0 0.0
    %379 = vmatpush.xpose.msra.mxu0 %v362
    %380 = vmatmul.f32.gmra.mxu0 %v360
    %v381 = vpop.f32.mrf.mxu0
    %v382 = vadd.f32 0.0, %v381
    %383 = vdwg.mxu0
    %v384 = vmul.f32 %v382, 0.35355338
    %v385 = vmul.f32 %v93, 0.00390625
    %v386 = vadd.f32 %v385, %v96
    %v387 = vperm.slane %v386, 0
    %v388 = vadd.f32 %v384, %v387
    %v389 = vsel %vm136, %v388, -inf
    %390 = vmax.xlane.f32.xlu0 %v389
    %v391 = vpop.xlane.xlu0 %390
    %v392 = vsub.f32 %v388, %v391
    %v393 = vmul.f32 %v392, 1.442695
    %v394 = vpow.pop %v393
    %v395 = vsel %vm136, %v394, 0.0
    %396 = vadd.xlane.f32.xlu0 %v395
    %v397 = vpop.xlane.xlu0 %396
    %v398 = vrcp.pop %v397
    %v399 = vmul.f32 %v394, %v398
    %400 = vrot.lane.b32.xlu0 %v129, 40
    %v401 = vpop.permute.xlu0 %400
    %v404 = vsel %vm136, %v399, 0
    %406 = vmatpush.msra.mxu0 0.0
    %407 = vmatpush.msra.mxu0 0.0
    %408 = vmatpush.msra.mxu0 0.0
    %409 = vmatpush.msra.mxu0 0.0
    %410 = vmatpush.msra.mxu0 0.0
    %411 = vmatpush.msra.mxu0 0.0
    %412 = vmatpush.msra.mxu0 0.0
    %413 = vmatpush.msra.mxu0 0.0
    %414 = vmatpush.msra.mxu0 0.0
    %415 = vmatpush.msra.mxu0 0.0
    %416 = vmatpush.msra.mxu0 0.0
    %417 = vmatpush.msra.mxu0 0.0
    %418 = vmatpush.msra.mxu0 0.0
    %419 = vmatpush.msra.mxu0 0.0
    %420 = vmatpush.msra.mxu0 0.0
    %421 = vmatpush.msra.mxu0 %v401
    %422 = vmatmul.f32.gmra.mxu0 %v404
    %v423 = vpop.f32.mrf.mxu0
    %v424 = vadd.f32 0.0, %v423
    %425 = vdwg.mxu0
    %427 = vrot.lane.b32.xlu0 %v424, 24
    %v428 = vpop.permute.xlu0 %427
    %vm430 = vcmask 261312
    %431 = vst.msk [vmem:[#allocation2] sm:$0xff] %vm430, %v428
    %433 = vrot.lane.b32.xlu0 %v131, 96
    %v434 = vpop.permute.xlu0 %433
    %v435 = vsel %vm136, %v131, 0
    %v437 = vsel %vm136, %v434, 0
    %439 = vmatpush.xpose.msra.mxu0 0.0
    %440 = vmatpush.xpose.msra.mxu0 0.0
    %441 = vmatpush.xpose.msra.mxu0 0.0
    %442 = vmatpush.xpose.msra.mxu0 0.0
    %443 = vmatpush.xpose.msra.mxu0 0.0
    %444 = vmatpush.xpose.msra.mxu0 0.0
    %445 = vmatpush.xpose.msra.mxu0 0.0
    %446 = vmatpush.xpose.msra.mxu0 0.0
    %447 = vmatpush.xpose.msra.mxu0 0.0
    %448 = vmatpush.xpose.msra.mxu0 0.0
    %449 = vmatpush.xpose.msra.mxu0 0.0
    %450 = vmatpush.xpose.msra.mxu0 0.0
    %451 = vmatpush.xpose.msra.mxu0 0.0
    %452 = vmatpush.xpose.msra.mxu0 0.0
    %453 = vmatpush.xpose.msra.mxu0 0.0
    %454 = vmatpush.xpose.msra.mxu0 %v437
    %455 = vmatmul.f32.gmra.mxu0 %v435
    %v456 = vpop.f32.mrf.mxu0
    %v457 = vadd.f32 0.0, %v456
    %458 = vdwg.mxu0
    %v459 = vmul.f32 %v457, 0.35355338
    %v460 = vperm.slane %v163, 1
    %v461 = vadd.f32 %v459, %v460
    %v462 = vsel %vm136, %v461, -inf
    %463 = vmax.xlane.f32.xlu0 %v462
    %v464 = vpop.xlane.xlu0 %463
    %v465 = vsub.f32 %v461, %v464
    %v466 = vmul.f32 %v465, 1.442695
    %v467 = vpow.pop %v466
    %v468 = vsel %vm136, %v467, 0.0
    %469 = vadd.xlane.f32.xlu0 %v468
    %v470 = vpop.xlane.xlu0 %469
    %v471 = vrcp.pop %v470
    %v472 = vmul.f32 %v467, %v471
    %473 = vrot.lane.b32.xlu0 %v131, 64
    %v474 = vpop.permute.xlu0 %473
    %v477 = vsel %vm136, %v472, 0
    %479 = vmatpush.msra.mxu0 0.0
    %480 = vmatpush.msra.mxu0 0.0
    %481 = vmatpush.msra.mxu0 0.0
    %482 = vmatpush.msra.mxu0 0.0
    %483 = vmatpush.msra.mxu0 0.0
    %484 = vmatpush.msra.mxu0 0.0
    %485 = vmatpush.msra.mxu0 0.0
    %486 = vmatpush.msra.mxu0 0.0
    %487 = vmatpush.msra.mxu0 0.0
    %488 = vmatpush.msra.mxu0 0.0
    %489 = vmatpush.msra.mxu0 0.0
    %490 = vmatpush.msra.mxu0 0.0
    %491 = vmatpush.msra.mxu0 0.0
    %492 = vmatpush.msra.mxu0 0.0
    %493 = vmatpush.msra.mxu0 0.0
    %494 = vmatpush.msra.mxu0 %v474
    %495 = vmatmul.f32.gmra.mxu0 %v477
    %v496 = vpop.f32.mrf.mxu0
    %v497 = vadd.f32 0.0, %v496
    %498 = vdwg.mxu0
    %499 = vst.msk [vmem:[#allocation2 + $0x8] sm:$0xff] %vm136, %v497
    %500 = vrot.lane.b32.xlu0 %v131, 120
    %v501 = vpop.permute.xlu0 %500
    %502 = vrot.lane.b32.xlu0 %v131, 88
    %v503 = vpop.permute.xlu0 %502
    %v504 = vsel %vm136, %v501, 0
    %v506 = vsel %vm136, %v503, 0
    %508 = vmatpush.xpose.msra.mxu0 0.0
    %509 = vmatpush.xpose.msra.mxu0 0.0
    %510 = vmatpush.xpose.msra.mxu0 0.0
    %511 = vmatpush.xpose.msra.mxu0 0.0
    %512 = vmatpush.xpose.msra.mxu0 0.0
    %513 = vmatpush.xpose.msra.mxu0 0.0
    %514 = vmatpush.xpose.msra.mxu0 0.0
    %515 = vmatpush.xpose.msra.mxu0 0.0
    %516 = vmatpush.xpose.msra.mxu0 0.0
    %517 = vmatpush.xpose.msra.mxu0 0.0
    %518 = vmatpush.xpose.msra.mxu0 0.0
    %519 = vmatpush.xpose.msra.mxu0 0.0
    %520 = vmatpush.xpose.msra.mxu0 0.0
    %521 = vmatpush.xpose.msra.mxu0 0.0
    %522 = vmatpush.xpose.msra.mxu0 0.0
    %523 = vmatpush.xpose.msra.mxu0 %v506
    %524 = vmatmul.f32.gmra.mxu0 %v504
    %v525 = vpop.f32.mrf.mxu0
    %v526 = vadd.f32 0.0, %v525
    %527 = vdwg.mxu0
    %v528 = vmul.f32 %v526, 0.35355338
    %v529 = vperm.slane %v234, 1
    %v530 = vadd.f32 %v528, %v529
    %v531 = vsel %vm136, %v530, -inf
    %532 = vmax.xlane.f32.xlu0 %v531
    %v533 = vpop.xlane.xlu0 %532
    %v534 = vsub.f32 %v530, %v533
    %v535 = vmul.f32 %v534, 1.442695
    %v536 = vpow.pop %v535
    %v537 = vsel %vm136, %v536, 0.0
    %538 = vadd.xlane.f32.xlu0 %v537
    %v539 = vpop.xlane.xlu0 %538
    %v540 = vrcp.pop %v539
    %v541 = vmul.f32 %v536, %v540
    %542 = vrot.lane.b32.xlu0 %v131, 56
    %v543 = vpop.permute.xlu0 %542
    %v546 = vsel %vm136, %v541, 0
    %548 = vmatpush.msra.mxu0 0.0
    %549 = vmatpush.msra.mxu0 0.0
    %550 = vmatpush.msra.mxu0 0.0
    %551 = vmatpush.msra.mxu0 0.0
    %552 = vmatpush.msra.mxu0 0.0
    %553 = vmatpush.msra.mxu0 0.0
    %554 = vmatpush.msra.mxu0 0.0
    %555 = vmatpush.msra.mxu0 0.0
    %556 = vmatpush.msra.mxu0 0.0
    %557 = vmatpush.msra.mxu0 0.0
    %558 = vmatpush.msra.mxu0 0.0
    %559 = vmatpush.msra.mxu0 0.0
    %560 = vmatpush.msra.mxu0 0.0
    %561 = vmatpush.msra.mxu0 0.0
    %562 = vmatpush.msra.mxu0 0.0
    %563 = vmatpush.msra.mxu0 %v543
    %564 = vmatmul.f32.gmra.mxu0 %v546
    %v565 = vpop.f32.mrf.mxu0
    %v566 = vadd.f32 0.0, %v565
    %567 = vdwg.mxu0
    %569 = vrot.lane.b32.xlu0 %v566, 8
    %v570 = vpop.permute.xlu0 %569
    %572 = vst.msk [vmem:[#allocation2 + $0x8] sm:$0xff] %vm278, %v570
    %573 = vrot.lane.b32.xlu0 %v131, 112
    %v574 = vpop.permute.xlu0 %573
    %575 = vrot.lane.b32.xlu0 %v131, 80
    %v576 = vpop.permute.xlu0 %575
    %v577 = vsel %vm136, %v574, 0
    %v579 = vsel %vm136, %v576, 0
    %581 = vmatpush.xpose.msra.mxu0 0.0
    %582 = vmatpush.xpose.msra.mxu0 0.0
    %583 = vmatpush.xpose.msra.mxu0 0.0
    %584 = vmatpush.xpose.msra.mxu0 0.0
    %585 = vmatpush.xpose.msra.mxu0 0.0
    %586 = vmatpush.xpose.msra.mxu0 0.0
    %587 = vmatpush.xpose.msra.mxu0 0.0
    %588 = vmatpush.xpose.msra.mxu0 0.0
    %589 = vmatpush.xpose.msra.mxu0 0.0
    %590 = vmatpush.xpose.msra.mxu0 0.0
    %591 = vmatpush.xpose.msra.mxu0 0.0
    %592 = vmatpush.xpose.msra.mxu0 0.0
    %593 = vmatpush.xpose.msra.mxu0 0.0
    %594 = vmatpush.xpose.msra.mxu0 0.0
    %595 = vmatpush.xpose.msra.mxu0 0.0
    %596 = vmatpush.xpose.msra.mxu0 %v579
    %597 = vmatmul.f32.gmra.mxu0 %v577
    %v598 = vpop.f32.mrf.mxu0
    %v599 = vadd.f32 0.0, %v598
    %600 = vdwg.mxu0
    %v601 = vmul.f32 %v599, 0.35355338
    %v602 = vperm.slane %v310, 1
    %v603 = vadd.f32 %v601, %v602
    %v604 = vsel %vm136, %v603, -inf
    %605 = vmax.xlane.f32.xlu0 %v604
    %v606 = vpop.xlane.xlu0 %605
    %v607 = vsub.f32 %v603, %v606
    %v608 = vmul.f32 %v607, 1.442695
    %v609 = vpow.pop %v608
    %v610 = vsel %vm136, %v609, 0.0
    %611 = vadd.xlane.f32.xlu0 %v610
    %v612 = vpop.xlane.xlu0 %611
    %v613 = vrcp.pop %v612
    %v614 = vmul.f32 %v609, %v613
    %615 = vrot.lane.b32.xlu0 %v131, 48
    %v616 = vpop.permute.xlu0 %615
    %v619 = vsel %vm136, %v614, 0
    %621 = vmatpush.msra.mxu0 0.0
    %622 = vmatpush.msra.mxu0 0.0
    %623 = vmatpush.msra.mxu0 0.0
    %624 = vmatpush.msra.mxu0 0.0
    %625 = vmatpush.msra.mxu0 0.0
    %626 = vmatpush.msra.mxu0 0.0
    %627 = vmatpush.msra.mxu0 0.0
    %628 = vmatpush.msra.mxu0 0.0
    %629 = vmatpush.msra.mxu0 0.0
    %630 = vmatpush.msra.mxu0 0.0
    %631 = vmatpush.msra.mxu0 0.0
    %632 = vmatpush.msra.mxu0 0.0
    %633 = vmatpush.msra.mxu0 0.0
    %634 = vmatpush.msra.mxu0 0.0
    %635 = vmatpush.msra.mxu0 0.0
    %636 = vmatpush.msra.mxu0 %v616
    %637 = vmatmul.f32.gmra.mxu0 %v619
    %v638 = vpop.f32.mrf.mxu0
    %v639 = vadd.f32 0.0, %v638
    %640 = vdwg.mxu0
    %642 = vrot.lane.b32.xlu0 %v639, 16
    %v643 = vpop.permute.xlu0 %642
    %645 = vst.msk [vmem:[#allocation2 + $0x8] sm:$0xff] %vm354, %v643
    %646 = vrot.lane.b32.xlu0 %v131, 104
    %v647 = vpop.permute.xlu0 %646
    %648 = vrot.lane.b32.xlu0 %v131, 72
    %v649 = vpop.permute.xlu0 %648
    %v650 = vsel %vm136, %v647, 0
    %v652 = vsel %vm136, %v649, 0
    %654 = vmatpush.xpose.msra.mxu0 0.0
    %655 = vmatpush.xpose.msra.mxu0 0.0
    %656 = vmatpush.xpose.msra.mxu0 0.0
    %657 = vmatpush.xpose.msra.mxu0 0.0
    %658 = vmatpush.xpose.msra.mxu0 0.0
    %659 = vmatpush.xpose.msra.mxu0 0.0
    %660 = vmatpush.xpose.msra.mxu0 0.0
    %661 = vmatpush.xpose.msra.mxu0 0.0
    %662 = vmatpush.xpose.msra.mxu0 0.0
    %663 = vmatpush.xpose.msra.mxu0 0.0
    %664 = vmatpush.xpose.msra.mxu0 0.0
    %665 = vmatpush.xpose.msra.mxu0 0.0
    %666 = vmatpush.xpose.msra.mxu0 0.0
    %667 = vmatpush.xpose.msra.mxu0 0.0
    %668 = vmatpush.xpose.msra.mxu0 0.0
    %669 = vmatpush.xpose.msra.mxu0 %v652
    %670 = vmatmul.f32.gmra.mxu0 %v650
    %v671 = vpop.f32.mrf.mxu0
    %v672 = vadd.f32 0.0, %v671
    %673 = vdwg.mxu0
    %v674 = vmul.f32 %v672, 0.35355338
    %v675 = vperm.slane %v386, 1
    %v676 = vadd.f32 %v674, %v675
    %v677 = vsel %vm136, %v676, -inf
    %678 = vmax.xlane.f32.xlu0 %v677
    %v679 = vpop.xlane.xlu0 %678
    %v680 = vsub.f32 %v676, %v679
    %v681 = vmul.f32 %v680, 1.442695
    %v682 = vpow.pop %v681
    %v683 = vsel %vm136, %v682, 0.0
    %684 = vadd.xlane.f32.xlu0 %v683
    %v685 = vpop.xlane.xlu0 %684
    %v686 = vrcp.pop %v685
    %v687 = vmul.f32 %v682, %v686
    %688 = vrot.lane.b32.xlu0 %v131, 40
    %v689 = vpop.permute.xlu0 %688
    %v692 = vsel %vm136, %v687, 0
    %694 = vmatpush.msra.mxu0 0.0
    %695 = vmatpush.msra.mxu0 0.0
    %696 = vmatpush.msra.mxu0 0.0
    %697 = vmatpush.msra.mxu0 0.0
    %698 = vmatpush.msra.mxu0 0.0
    %699 = vmatpush.msra.mxu0 0.0
    %700 = vmatpush.msra.mxu0 0.0
    %701 = vmatpush.msra.mxu0 0.0
    %702 = vmatpush.msra.mxu0 0.0
    %703 = vmatpush.msra.mxu0 0.0
    %704 = vmatpush.msra.mxu0 0.0
    %705 = vmatpush.msra.mxu0 0.0
    %706 = vmatpush.msra.mxu0 0.0
    %707 = vmatpush.msra.mxu0 0.0
    %708 = vmatpush.msra.mxu0 0.0
    %709 = vmatpush.msra.mxu0 %v689
    %710 = vmatmul.f32.gmra.mxu0 %v692
    %v711 = vpop.f32.mrf.mxu0
    %v712 = vadd.f32 0.0, %v711
    %713 = vdwg.mxu0
    %715 = vrot.lane.b32.xlu0 %v712, 24
    %v716 = vpop.permute.xlu0 %715
    %718 = vst.msk [vmem:[#allocation2 + $0x8] sm:$0xff] %vm430, %v716
    %v719 = vld [vmem:[#allocation2] sm:$0xff]
    %v720 = vld [vmem:[#allocation2 + $0x8] sm:$0xff]
    %v721 = vpack.c.bf16 %v720, %v719
    %v722 = vld [vmem:[%s4] sm:$0xf]
    %v723 = vld [vmem:[%s4 + $0x4] sm:$0xf]
    %v724 = vld [vmem:[%s4 + $0x8] sm:$0xf]
    %v725 = vld [vmem:[%s4 + $0xc] sm:$0xf]
    %v726 = vld [vmem:[%s7 + $0x3] sm:$0x1]
    %v727 = vperm.slane %v726, 0
    %v732 = vunpack.c.l.b16 %v722
    %v733 = vunpack.c.l.b16 %v723
    %v734 = vunpack.c.l.b16 %v724
    %v735 = vunpack.c.l.b16 %v725
    %v736 = vpack.c.b16 %v733, %v732
    %v737 = vpack.c.b16 %v735, %v734
    %v741 = vsel %vm35, %v721, 0
    %743 = vmatpush.bf16.msra.mxu0 0
    %744 = vmatpush.bf16.msra.mxu0 0
    %745 = vmatpush.bf16.msra.mxu0 0
    %746 = vmatpush.bf16.msra.mxu0 0
    %747 = vmatpush.bf16.msra.mxu0 0
    %748 = vmatpush.bf16.msra.mxu0 0
    %749 = vmatpush.bf16.msra.mxu0 %v737
    %750 = vmatpush.bf16.msra.mxu0 %v736
    %751 = vmatmul.bf16.gmra.mxu0 %v741
    %v752 = vpop.f32.mrf.mxu0
    %v753 = vadd.f32 %v727, %v752
    %v754 = vpop.f32.mrf.mxu0
    %v755 = vadd.f32 %v727, %v754
    %756 = vdwg.mxu0
    %v757 = vadd.f32 %v91, %v753
    %v758 = vadd.f32 %v92, %v755
    %v759 = vld [vmem:[%s7 + $0x4] sm:$0x1]
    %v760 = vld [vmem:[%s7 + $0x5] sm:$0x1]
    %v761 = vsel %vm35, %v757, 0.0
    %762 = vadd.xlane.f32.xlu0 %v761
    %v763 = vpop.xlane.xlu0 %762
    %v764 = vsel %vm35, %v758, 0.0
    %765 = vadd.xlane.f32.xlu0 %v764
    %v766 = vpop.xlane.xlu0 %765
    %v767 = vmul.f32 %v763, %v48
    %v768 = vmul.f32 %v766, %v48
    %v769 = vsub.f32 %v757, %v767
    %v770 = vsub.f32 %v758, %v768
    %v771 = vmul.f32 %v769, %v769
    %v772 = vmul.f32 %v770, %v770
    %v773 = vsel %vm35, %v771, 0.0
    %774 = vadd.xlane.f32.xlu0 %v773
    %v775 = vpop.xlane.xlu0 %774
    %v776 = vsel %vm35, %v772, 0.0
    %777 = vadd.xlane.f32.xlu0 %v776
    %v778 = vpop.xlane.xlu0 %777
    %v779 = vmul.f32 %v775, %v48
    %v780 = vmul.f32 %v778, %v48
    %v781 = vadd.f32 %v779, 1e-05
    %v782 = vadd.f32 %v780, 1e-05
    %v783 = vrsqrt.pop %v781
    %v784 = vmul.f32 %v783, %v781
    %v785 = vmul.f32 %v784, %v783
    %v786 = vmul.f32 0.5, %v785
    %v787 = vsub.f32 1.5, %v786
    %v788 = vmul.f32 %v783, %v787
    %vm789 = vweird.f32 %v781
    %vm790 = vweird.f32 %v783
    %vm791 = vmor %vm789, %vm790
    %v792 = vsel %vm791, %v783, %v788
    %v793 = vrsqrt.pop %v782
    %v794 = vmul.f32 %v793, %v782
    %v795 = vmul.f32 %v794, %v793
    %v796 = vmul.f32 0.5, %v795
    %v797 = vsub.f32 1.5, %v796
    %v798 = vmul.f32 %v793, %v797
    %vm799 = vweird.f32 %v782
    %vm800 = vweird.f32 %v793
    %vm801 = vmor %vm799, %vm800
    %v802 = vsel %vm801, %v793, %v798
    %v803 = vmul.f32 %v769, %v792
    %v804 = vmul.f32 %v770, %v802
    %v805 = vperm.slane %v759, 0
    %v806 = vmul.f32 %v803, %v805
    %v807 = vmul.f32 %v804, %v805
    %v808 = vperm.slane %v760, 0
    %v809 = vadd.f32 %v806, %v808
    %v810 = vadd.f32 %v807, %v808
    %v811 = vpack.c.bf16 %v810, %v809
    %v812 = vld [vmem:[%s5] sm:$0xf]
    %v813 = vld [vmem:[%s5 + $0x4] sm:$0xf]
    %v814 = vld [vmem:[%s5 + $0x8] sm:$0xf]
    %v815 = vld [vmem:[%s5 + $0xc] sm:$0xf]
    %v816 = vld [vmem:[%s7 + $0x8] sm:$0x1]
    %v817 = vperm.slane %v816, 0
    %v822 = vunpack.c.l.b16 %v812
    %v823 = vunpack.c.l.b16 %v813
    %v824 = vunpack.c.l.b16 %v814
    %v825 = vunpack.c.l.b16 %v815
    %v826 = vpack.c.b16 %v823, %v822
    %v827 = vpack.c.b16 %v825, %v824
    %v831 = vsel %vm35, %v811, 0
    %833 = vmatpush.bf16.msra.mxu0 0
    %834 = vmatpush.bf16.msra.mxu0 0
    %835 = vmatpush.bf16.msra.mxu0 0
    %836 = vmatpush.bf16.msra.mxu0 0
    %837 = vmatpush.bf16.msra.mxu0 0
    %838 = vmatpush.bf16.msra.mxu0 0
    %839 = vmatpush.bf16.msra.mxu0 %v827
    %840 = vmatpush.bf16.msra.mxu0 %v826
    %841 = vmatmul.bf16.gmra.mxu0 %v831
    %v842 = vpop.f32.mrf.mxu0
    %v843 = vadd.f32 %v817, %v842
    %v844 = vpop.f32.mrf.mxu0
    %v845 = vadd.f32 %v817, %v844
    %846 = vdwg.mxu0
    %v847 = vmax.f32 %v843, 0.0
    %v848 = vmax.f32 %v845, 0.0
    %v849 = vpack.c.bf16 %v848, %v847
    %v850 = vld [vmem:[%s6] sm:$0xf]
    %v851 = vld [vmem:[%s6 + $0x4] sm:$0xf]
    %v852 = vld [vmem:[%s6 + $0x8] sm:$0xf]
    %v853 = vld [vmem:[%s6 + $0xc] sm:$0xf]
    %v854 = vld [vmem:[%s6 + $0x10] sm:$0xf]
    %v855 = vld [vmem:[%s6 + $0x14] sm:$0xf]
    %v856 = vld [vmem:[%s6 + $0x18] sm:$0xf]
    %v857 = vld [vmem:[%s6 + $0x1c] sm:$0xf]
    %v858 = vld [vmem:[%s6 + $0x20] sm:$0xf]
    %v859 = vld [vmem:[%s6 + $0x24] sm:$0xf]
    %v860 = vld [vmem:[%s6 + $0x28] sm:$0xf]
    %v861 = vld [vmem:[%s6 + $0x2c] sm:$0xf]
    %v862 = vld [vmem:[%s6 + $0x30] sm:$0xf]
    %v863 = vld [vmem:[%s6 + $0x34] sm:$0xf]
    %v864 = vld [vmem:[%s6 + $0x38] sm:$0xf]
    %v865 = vld [vmem:[%s6 + $0x3c] sm:$0xf]
    %v866 = vld [vmem:[%s7 + $0x9] sm:$0x1]
    %v867 = vperm.slane %v866, 0
    %v884 = vunpack.c.l.b16 %v850
    %v885 = vunpack.c.l.b16 %v851
    %v886 = vunpack.c.l.b16 %v852
    %v887 = vunpack.c.l.b16 %v853
    %v888 = vunpack.c.l.b16 %v854
    %v889 = vunpack.c.l.b16 %v855
    %v890 = vunpack.c.l.b16 %v856
    %v891 = vunpack.c.l.b16 %v857
    %v892 = vunpack.c.l.b16 %v858
    %v893 = vunpack.c.l.b16 %v859
    %v894 = vunpack.c.l.b16 %v860
    %v895 = vunpack.c.l.b16 %v861
    %v896 = vunpack.c.l.b16 %v862
    %v897 = vunpack.c.l.b16 %v863
    %v898 = vunpack.c.l.b16 %v864
    %v899 = vunpack.c.l.b16 %v865
    %v900 = vpack.c.b16 %v885, %v884
    %v901 = vpack.c.b16 %v887, %v886
    %v902 = vpack.c.b16 %v889, %v888
    %v903 = vpack.c.b16 %v891, %v890
    %v904 = vpack.c.b16 %v893, %v892
    %v905 = vpack.c.b16 %v895, %v894
    %v906 = vpack.c.b16 %v897, %v896
    %v907 = vpack.c.b16 %v899, %v898
    %916 = vmatpush.bf16.msra.mxu0 %v907
    %917 = vmatpush.bf16.msra.mxu0 %v906
    %918 = vmatpush.bf16.msra.mxu0 %v905
    %919 = vmatpush.bf16.msra.mxu0 %v904
    %920 = vmatpush.bf16.msra.mxu0 %v903
    %921 = vmatpush.bf16.msra.mxu0 %v902
    %922 = vmatpush.bf16.msra.mxu0 %v901
    %923 = vmatpush.bf16.msra.mxu0 %v900
    %924 = vmatmul.bf16.gmra.mxu0 %v849
    %v925 = vpop.f32.mrf.mxu0
    %v926 = vadd.f32 %v867, %v925
    %v927 = vpop.f32.mrf.mxu0
    %v928 = vadd.f32 %v867, %v927
    %929 = vdwg.mxu0
    %v930 = vadd.f32 %v809, %v926
    %v931 = vadd.f32 %v810, %v928
    %v932 = vld [vmem:[%s7 + $0x6] sm:$0x1]
    %v933 = vld [vmem:[%s7 + $0x7] sm:$0x1]
    %v934 = vsel %vm35, %v930, 0.0
    %935 = vadd.xlane.f32.xlu0 %v934
    %v936 = vpop.xlane.xlu0 %935
    %v937 = vsel %vm35, %v931, 0.0
    %938 = vadd.xlane.f32.xlu0 %v937
    %v939 = vpop.xlane.xlu0 %938
    %v940 = vmul.f32 %v936, %v48
    %v941 = vmul.f32 %v939, %v48
    %v942 = vsub.f32 %v930, %v940
    %v943 = vsub.f32 %v931, %v941
    %v944 = vmul.f32 %v942, %v942
    %v945 = vmul.f32 %v943, %v943
    %v946 = vsel %vm35, %v944, 0.0
    %947 = vadd.xlane.f32.xlu0 %v946
    %v948 = vpop.xlane.xlu0 %947
    %v949 = vsel %vm35, %v945, 0.0
    %950 = vadd.xlane.f32.xlu0 %v949
    %v951 = vpop.xlane.xlu0 %950
    %v952 = vmul.f32 %v948, %v48
    %v953 = vmul.f32 %v951, %v48
    %v954 = vadd.f32 %v952, 1e-05
    %v955 = vadd.f32 %v953, 1e-05
    %v956 = vrsqrt.pop %v954
    %v957 = vmul.f32 %v956, %v954
    %v958 = vmul.f32 %v957, %v956
    %v959 = vmul.f32 0.5, %v958
    %v960 = vsub.f32 1.5, %v959
    %v961 = vmul.f32 %v956, %v960
    %vm962 = vweird.f32 %v954
    %vm963 = vweird.f32 %v956
    %vm964 = vmor %vm962, %vm963
    %v965 = vsel %vm964, %v956, %v961
    %v966 = vrsqrt.pop %v955
    %v967 = vmul.f32 %v966, %v955
    %v968 = vmul.f32 %v967, %v966
    %v969 = vmul.f32 0.5, %v968
    %v970 = vsub.f32 1.5, %v969
    %v971 = vmul.f32 %v966, %v970
    %vm972 = vweird.f32 %v955
    %vm973 = vweird.f32 %v966
    %vm974 = vmor %vm972, %vm973
    %v975 = vsel %vm974, %v966, %v971
    %v976 = vmul.f32 %v942, %v965
    %v977 = vmul.f32 %v943, %v975
    %v978 = vperm.slane %v932, 0
    %v979 = vmul.f32 %v976, %v978
    %v980 = vmul.f32 %v977, %v978
    %v981 = vperm.slane %v933, 0
    %v982 = vadd.f32 %v979, %v981
    %v983 = vadd.f32 %v980, %v981
    %v984 = vpack.c.bf16 %v983, %v982
    %s985 = scalar_lea.vmem %s3, 16
    %v986 = vld [vmem:[%s985] sm:$0xf]
    %v987 = vld [vmem:[%s985 + $0x4] sm:$0xf]
    %v988 = vld [vmem:[%s985 + $0x8] sm:$0xf]
    %v989 = vld [vmem:[%s985 + $0xc] sm:$0xf]
    %v990 = vld [vmem:[%s7 + $0xa] sm:$0x1]
    %v991 = vperm.slane %v990, 0
    %v996 = vunpack.c.l.b16 %v986
    %v997 = vunpack.c.l.b16 %v987
    %v998 = vunpack.c.l.b16 %v988
    %v999 = vunpack.c.l.b16 %v989
    %v1000 = vpack.c.b16 %v997, %v996
    %v1001 = vpack.c.b16 %v999, %v998
    %v1005 = vsel %vm35, %v984, 0
    %1007 = vmatpush.bf16.msra.mxu0 0
    %1008 = vmatpush.bf16.msra.mxu0 0
    %1009 = vmatpush.bf16.msra.mxu0 0
    %1010 = vmatpush.bf16.msra.mxu0 0
    %1011 = vmatpush.bf16.msra.mxu0 0
    %1012 = vmatpush.bf16.msra.mxu0 0
    %1013 = vmatpush.bf16.msra.mxu0 %v1001
    %1014 = vmatpush.bf16.msra.mxu0 %v1000
    %1015 = vmatmul.bf16.gmra.mxu0 %v1005
    %v1016 = vpop.f32.mrf.mxu0
    %v1017 = vadd.f32 %v991, %v1016
    %v1018 = vpop.f32.mrf.mxu0
    %v1019 = vadd.f32 %v991, %v1018
    %1020 = vdwg.mxu0
    %1022 = vrot.lane.b32.xlu0 %v1017, 96
    %v1023 = vpop.permute.xlu0 %1022
    %v1024 = vsel %vm136, %v1017, 0
    %v1026 = vsel %vm136, %v1023, 0
    %1028 = vmatpush.xpose.msra.mxu0 0.0
    %1029 = vmatpush.xpose.msra.mxu0 0.0
    %1030 = vmatpush.xpose.msra.mxu0 0.0
    %1031 = vmatpush.xpose.msra.mxu0 0.0
    %1032 = vmatpush.xpose.msra.mxu0 0.0
    %1033 = vmatpush.xpose.msra.mxu0 0.0
    %1034 = vmatpush.xpose.msra.mxu0 0.0
    %1035 = vmatpush.xpose.msra.mxu0 0.0
    %1036 = vmatpush.xpose.msra.mxu0 0.0
    %1037 = vmatpush.xpose.msra.mxu0 0.0
    %1038 = vmatpush.xpose.msra.mxu0 0.0
    %1039 = vmatpush.xpose.msra.mxu0 0.0
    %1040 = vmatpush.xpose.msra.mxu0 0.0
    %1041 = vmatpush.xpose.msra.mxu0 0.0
    %1042 = vmatpush.xpose.msra.mxu0 0.0
    %1043 = vmatpush.xpose.msra.mxu0 %v1026
    %1044 = vmatmul.f32.gmra.mxu0 %v1024
    %v1045 = vpop.f32.mrf.mxu0
    %v1046 = vadd.f32 0.0, %v1045
    %1047 = vdwg.mxu0
    %v1048 = vmul.f32 %v1046, 0.35355338
    %v1049 = vadd.f32 %v1048, %v164
    %v1050 = vsel %vm136, %v1049, -inf
    %1051 = vmax.xlane.f32.xlu0 %v1050
    %v1052 = vpop.xlane.xlu0 %1051
    %v1053 = vsub.f32 %v1049, %v1052
    %v1054 = vmul.f32 %v1053, 1.442695
    %v1055 = vpow.pop %v1054
    %v1056 = vsel %vm136, %v1055, 0.0
    %1057 = vadd.xlane.f32.xlu0 %v1056
    %v1058 = vpop.xlane.xlu0 %1057
    %v1059 = vrcp.pop %v1058
    %v1060 = vmul.f32 %v1055, %v1059
    %1061 = vrot.lane.b32.xlu0 %v1017, 64
    %v1062 = vpop.permute.xlu0 %1061
    %v1065 = vsel %vm136, %v1060, 0
    %1067 = vmatpush.msra.mxu0 0.0
    %1068 = vmatpush.msra.mxu0 0.0
    %1069 = vmatpush.msra.mxu0 0.0
    %1070 = vmatpush.msra.mxu0 0.0
    %1071 = vmatpush.msra.mxu0 0.0
    %1072 = vmatpush.msra.mxu0 0.0
    %1073 = vmatpush.msra.mxu0 0.0
    %1074 = vmatpush.msra.mxu0 0.0
    %1075 = vmatpush.msra.mxu0 0.0
    %1076 = vmatpush.msra.mxu0 0.0
    %1077 = vmatpush.msra.mxu0 0.0
    %1078 = vmatpush.msra.mxu0 0.0
    %1079 = vmatpush.msra.mxu0 0.0
    %1080 = vmatpush.msra.mxu0 0.0
    %1081 = vmatpush.msra.mxu0 0.0
    %1082 = vmatpush.msra.mxu0 %v1062
    %1083 = vmatmul.f32.gmra.mxu0 %v1065
    %v1084 = vpop.f32.mrf.mxu0
    %v1085 = vadd.f32 0.0, %v1084
    %1086 = vdwg.mxu0
    %1087 = vst.msk [vmem:[#allocation2] sm:$0xff] %vm136, %v1085
    %1088 = vrot.lane.b32.xlu0 %v1017, 120
    %v1089 = vpop.permute.xlu0 %1088
    %1090 = vrot.lane.b32.xlu0 %v1017, 88
    %v1091 = vpop.permute.xlu0 %1090
    %v1092 = vsel %vm136, %v1089, 0
    %v1094 = vsel %vm136, %v1091, 0
    %1096 = vmatpush.xpose.msra.mxu0 0.0
    %1097 = vmatpush.xpose.msra.mxu0 0.0
    %1098 = vmatpush.xpose.msra.mxu0 0.0
    %1099 = vmatpush.xpose.msra.mxu0 0.0
    %1100 = vmatpush.xpose.msra.mxu0 0.0
    %1101 = vmatpush.xpose.msra.mxu0 0.0
    %1102 = vmatpush.xpose.msra.mxu0 0.0
    %1103 = vmatpush.xpose.msra.mxu0 0.0
    %1104 = vmatpush.xpose.msra.mxu0 0.0
    %1105 = vmatpush.xpose.msra.mxu0 0.0
    %1106 = vmatpush.xpose.msra.mxu0 0.0
    %1107 = vmatpush.xpose.msra.mxu0 0.0
    %1108 = vmatpush.xpose.msra.mxu0 0.0
    %1109 = vmatpush.xpose.msra.mxu0 0.0
    %1110 = vmatpush.xpose.msra.mxu0 0.0
    %1111 = vmatpush.xpose.msra.mxu0 %v1094
    %1112 = vmatmul.f32.gmra.mxu0 %v1092
    %v1113 = vpop.f32.mrf.mxu0
    %v1114 = vadd.f32 0.0, %v1113
    %1115 = vdwg.mxu0
    %v1116 = vmul.f32 %v1114, 0.35355338
    %v1117 = vadd.f32 %v1116, %v235
    %v1118 = vsel %vm136, %v1117, -inf
    %1119 = vmax.xlane.f32.xlu0 %v1118
    %v1120 = vpop.xlane.xlu0 %1119
    %v1121 = vsub.f32 %v1117, %v1120
    %v1122 = vmul.f32 %v1121, 1.442695
    %v1123 = vpow.pop %v1122
    %v1124 = vsel %vm136, %v1123, 0.0
    %1125 = vadd.xlane.f32.xlu0 %v1124
    %v1126 = vpop.xlane.xlu0 %1125
    %v1127 = vrcp.pop %v1126
    %v1128 = vmul.f32 %v1123, %v1127
    %1129 = vrot.lane.b32.xlu0 %v1017, 56
    %v1130 = vpop.permute.xlu0 %1129
    %v1133 = vsel %vm136, %v1128, 0
    %1135 = vmatpush.msra.mxu0 0.0
    %1136 = vmatpush.msra.mxu0 0.0
    %1137 = vmatpush.msra.mxu0 0.0
    %1138 = vmatpush.msra.mxu0 0.0
    %1139 = vmatpush.msra.mxu0 0.0
    %1140 = vmatpush.msra.mxu0 0.0
    %1141 = vmatpush.msra.mxu0 0.0
    %1142 = vmatpush.msra.mxu0 0.0
    %1143 = vmatpush.msra.mxu0 0.0
    %1144 = vmatpush.msra.mxu0 0.0
    %1145 = vmatpush.msra.mxu0 0.0
    %1146 = vmatpush.msra.mxu0 0.0
    %1147 = vmatpush.msra.mxu0 0.0
    %1148 = vmatpush.msra.mxu0 0.0
    %1149 = vmatpush.msra.mxu0 0.0
    %1150 = vmatpush.msra.mxu0 %v1130
    %1151 = vmatmul.f32.gmra.mxu0 %v1133
    %v1152 = vpop.f32.mrf.mxu0
    %v1153 = vadd.f32 0.0, %v1152
    %1154 = vdwg.mxu0
    %1156 = vrot.lane.b32.xlu0 %v1153, 8
    %v1157 = vpop.permute.xlu0 %1156
    %1159 = vst.msk [vmem:[#allocation2] sm:$0xff] %vm278, %v1157
    %1160 = vrot.lane.b32.xlu0 %v1017, 112
    %v1161 = vpop.permute.xlu0 %1160
    %1162 = vrot.lane.b32.xlu0 %v1017, 80
    %v1163 = vpop.permute.xlu0 %1162
    %v1164 = vsel %vm136, %v1161, 0
    %v1166 = vsel %vm136, %v1163, 0
    %1168 = vmatpush.xpose.msra.mxu0 0.0
    %1169 = vmatpush.xpose.msra.mxu0 0.0
    %1170 = vmatpush.xpose.msra.mxu0 0.0
    %1171 = vmatpush.xpose.msra.mxu0 0.0
    %1172 = vmatpush.xpose.msra.mxu0 0.0
    %1173 = vmatpush.xpose.msra.mxu0 0.0
    %1174 = vmatpush.xpose.msra.mxu0 0.0
    %1175 = vmatpush.xpose.msra.mxu0 0.0
    %1176 = vmatpush.xpose.msra.mxu0 0.0
    %1177 = vmatpush.xpose.msra.mxu0 0.0
    %1178 = vmatpush.xpose.msra.mxu0 0.0
    %1179 = vmatpush.xpose.msra.mxu0 0.0
    %1180 = vmatpush.xpose.msra.mxu0 0.0
    %1181 = vmatpush.xpose.msra.mxu0 0.0
    %1182 = vmatpush.xpose.msra.mxu0 0.0
    %1183 = vmatpush.xpose.msra.mxu0 %v1166
    %1184 = vmatmul.f32.gmra.mxu0 %v1164
    %v1185 = vpop.f32.mrf.mxu0
    %v1186 = vadd.f32 0.0, %v1185
    %1187 = vdwg.mxu0
    %v1188 = vmul.f32 %v1186, 0.35355338
    %v1189 = vadd.f32 %v1188, %v311
    %v1190 = vsel %vm136, %v1189, -inf
    %1191 = vmax.xlane.f32.xlu0 %v1190
    %v1192 = vpop.xlane.xlu0 %1191
    %v1193 = vsub.f32 %v1189, %v1192
    %v1194 = vmul.f32 %v1193, 1.442695
    %v1195 = vpow.pop %v1194
    %v1196 = vsel %vm136, %v1195, 0.0
    %1197 = vadd.xlane.f32.xlu0 %v1196
    %v1198 = vpop.xlane.xlu0 %1197
    %v1199 = vrcp.pop %v1198
    %v1200 = vmul.f32 %v1195, %v1199
    %1201 = vrot.lane.b32.xlu0 %v1017, 48
    %v1202 = vpop.permute.xlu0 %1201
    %v1205 = vsel %vm136, %v1200, 0
    %1207 = vmatpush.msra.mxu0 0.0
    %1208 = vmatpush.msra.mxu0 0.0
    %1209 = vmatpush.msra.mxu0 0.0
    %1210 = vmatpush.msra.mxu0 0.0
    %1211 = vmatpush.msra.mxu0 0.0
    %1212 = vmatpush.msra.mxu0 0.0
    %1213 = vmatpush.msra.mxu0 0.0
    %1214 = vmatpush.msra.mxu0 0.0
    %1215 = vmatpush.msra.mxu0 0.0
    %1216 = vmatpush.msra.mxu0 0.0
    %1217 = vmatpush.msra.mxu0 0.0
    %1218 = vmatpush.msra.mxu0 0.0
    %1219 = vmatpush.msra.mxu0 0.0
    %1220 = vmatpush.msra.mxu0 0.0
    %1221 = vmatpush.msra.mxu0 0.0
    %1222 = vmatpush.msra.mxu0 %v1202
    %1223 = vmatmul.f32.gmra.mxu0 %v1205
    %v1224 = vpop.f32.mrf.mxu0
    %v1225 = vadd.f32 0.0, %v1224
    %1226 = vdwg.mxu0
    %1228 = vrot.lane.b32.xlu0 %v1225, 16
    %v1229 = vpop.permute.xlu0 %1228
    %1231 = vst.msk [vmem:[#allocation2] sm:$0xff] %vm354, %v1229
    %1232 = vrot.lane.b32.xlu0 %v1017, 104
    %v1233 = vpop.permute.xlu0 %1232
    %1234 = vrot.lane.b32.xlu0 %v1017, 72
    %v1235 = vpop.permute.xlu0 %1234
    %v1236 = vsel %vm136, %v1233, 0
    %v1238 = vsel %vm136, %v1235, 0
    %1240 = vmatpush.xpose.msra.mxu0 0.0
    %1241 = vmatpush.xpose.msra.mxu0 0.0
    %1242 = vmatpush.xpose.msra.mxu0 0.0
    %1243 = vmatpush.xpose.msra.mxu0 0.0
    %1244 = vmatpush.xpose.msra.mxu0 0.0
    %1245 = vmatpush.xpose.msra.mxu0 0.0
    %1246 = vmatpush.xpose.msra.mxu0 0.0
    %1247 = vmatpush.xpose.msra.mxu0 0.0
    %1248 = vmatpush.xpose.msra.mxu0 0.0
    %1249 = vmatpush.xpose.msra.mxu0 0.0
    %1250 = vmatpush.xpose.msra.mxu0 0.0
    %1251 = vmatpush.xpose.msra.mxu0 0.0
    %1252 = vmatpush.xpose.msra.mxu0 0.0
    %1253 = vmatpush.xpose.msra.mxu0 0.0
    %1254 = vmatpush.xpose.msra.mxu0 0.0
    %1255 = vmatpush.xpose.msra.mxu0 %v1238
    %1256 = vmatmul.f32.gmra.mxu0 %v1236
    %v1257 = vpop.f32.mrf.mxu0
    %v1258 = vadd.f32 0.0, %v1257
    %1259 = vdwg.mxu0
    %v1260 = vmul.f32 %v1258, 0.35355338
    %v1261 = vadd.f32 %v1260, %v387
    %v1262 = vsel %vm136, %v1261, -inf
    %1263 = vmax.xlane.f32.xlu0 %v1262
    %v1264 = vpop.xlane.xlu0 %1263
    %v1265 = vsub.f32 %v1261, %v1264
    %v1266 = vmul.f32 %v1265, 1.442695
    %v1267 = vpow.pop %v1266
    %v1268 = vsel %vm136, %v1267, 0.0
    %1269 = vadd.xlane.f32.xlu0 %v1268
    %v1270 = vpop.xlane.xlu0 %1269
    %v1271 = vrcp.pop %v1270
    %v1272 = vmul.f32 %v1267, %v1271
    %1273 = vrot.lane.b32.xlu0 %v1017, 40
    %v1274 = vpop.permute.xlu0 %1273
    %v1277 = vsel %vm136, %v1272, 0
    %1279 = vmatpush.msra.mxu0 0.0
    %1280 = vmatpush.msra.mxu0 0.0
    %1281 = vmatpush.msra.mxu0 0.0
    %1282 = vmatpush.msra.mxu0 0.0
    %1283 = vmatpush.msra.mxu0 0.0
    %1284 = vmatpush.msra.mxu0 0.0
    %1285 = vmatpush.msra.mxu0 0.0
    %1286 = vmatpush.msra.mxu0 0.0
    %1287 = vmatpush.msra.mxu0 0.0
    %1288 = vmatpush.msra.mxu0 0.0
    %1289 = vmatpush.msra.mxu0 0.0
    %1290 = vmatpush.msra.mxu0 0.0
    %1291 = vmatpush.msra.mxu0 0.0
    %1292 = vmatpush.msra.mxu0 0.0
    %1293 = vmatpush.msra.mxu0 0.0
    %1294 = vmatpush.msra.mxu0 %v1274
    %1295 = vmatmul.f32.gmra.mxu0 %v1277
    %v1296 = vpop.f32.mrf.mxu0
    %v1297 = vadd.f32 0.0, %v1296
    %1298 = vdwg.mxu0
    %1300 = vrot.lane.b32.xlu0 %v1297, 24
    %v1301 = vpop.permute.xlu0 %1300
    %1303 = vst.msk [vmem:[#allocation2] sm:$0xff] %vm430, %v1301
    %1305 = vrot.lane.b32.xlu0 %v1019, 96
    %v1306 = vpop.permute.xlu0 %1305
    %v1307 = vsel %vm136, %v1019, 0
    %v1309 = vsel %vm136, %v1306, 0
    %1311 = vmatpush.xpose.msra.mxu0 0.0
    %1312 = vmatpush.xpose.msra.mxu0 0.0
    %1313 = vmatpush.xpose.msra.mxu0 0.0
    %1314 = vmatpush.xpose.msra.mxu0 0.0
    %1315 = vmatpush.xpose.msra.mxu0 0.0
    %1316 = vmatpush.xpose.msra.mxu0 0.0
    %1317 = vmatpush.xpose.msra.mxu0 0.0
    %1318 = vmatpush.xpose.msra.mxu0 0.0
    %1319 = vmatpush.xpose.msra.mxu0 0.0
    %1320 = vmatpush.xpose.msra.mxu0 0.0
    %1321 = vmatpush.xpose.msra.mxu0 0.0
    %1322 = vmatpush.xpose.msra.mxu0 0.0
    %1323 = vmatpush.xpose.msra.mxu0 0.0
    %1324 = vmatpush.xpose.msra.mxu0 0.0
    %1325 = vmatpush.xpose.msra.mxu0 0.0
    %1326 = vmatpush.xpose.msra.mxu0 %v1309
    %1327 = vmatmul.f32.gmra.mxu0 %v1307
    %v1328 = vpop.f32.mrf.mxu0
    %v1329 = vadd.f32 0.0, %v1328
    %1330 = vdwg.mxu0
    %v1331 = vmul.f32 %v1329, 0.35355338
    %v1332 = vadd.f32 %v1331, %v460
    %v1333 = vsel %vm136, %v1332, -inf
    %1334 = vmax.xlane.f32.xlu0 %v1333
    %v1335 = vpop.xlane.xlu0 %1334
    %v1336 = vsub.f32 %v1332, %v1335
    %v1337 = vmul.f32 %v1336, 1.442695
    %v1338 = vpow.pop %v1337
    %v1339 = vsel %vm136, %v1338, 0.0
    %1340 = vadd.xlane.f32.xlu0 %v1339
    %v1341 = vpop.xlane.xlu0 %1340
    %v1342 = vrcp.pop %v1341
    %v1343 = vmul.f32 %v1338, %v1342
    %1344 = vrot.lane.b32.xlu0 %v1019, 64
    %v1345 = vpop.permute.xlu0 %1344
    %v1348 = vsel %vm136, %v1343, 0
    %1350 = vmatpush.msra.mxu0 0.0
    %1351 = vmatpush.msra.mxu0 0.0
    %1352 = vmatpush.msra.mxu0 0.0
    %1353 = vmatpush.msra.mxu0 0.0
    %1354 = vmatpush.msra.mxu0 0.0
    %1355 = vmatpush.msra.mxu0 0.0
    %1356 = vmatpush.msra.mxu0 0.0
    %1357 = vmatpush.msra.mxu0 0.0
    %1358 = vmatpush.msra.mxu0 0.0
    %1359 = vmatpush.msra.mxu0 0.0
    %1360 = vmatpush.msra.mxu0 0.0
    %1361 = vmatpush.msra.mxu0 0.0
    %1362 = vmatpush.msra.mxu0 0.0
    %1363 = vmatpush.msra.mxu0 0.0
    %1364 = vmatpush.msra.mxu0 0.0
    %1365 = vmatpush.msra.mxu0 %v1345
    %1366 = vmatmul.f32.gmra.mxu0 %v1348
    %v1367 = vpop.f32.mrf.mxu0
    %v1368 = vadd.f32 0.0, %v1367
    %1369 = vdwg.mxu0
    %1370 = vst.msk [vmem:[#allocation2 + $0x8] sm:$0xff] %vm136, %v1368
    %1371 = vrot.lane.b32.xlu0 %v1019, 120
    %v1372 = vpop.permute.xlu0 %1371
    %1373 = vrot.lane.b32.xlu0 %v1019, 88
    %v1374 = vpop.permute.xlu0 %1373
    %v1375 = vsel %vm136, %v1372, 0
    %v1377 = vsel %vm136, %v1374, 0
    %1379 = vmatpush.xpose.msra.mxu0 0.0
    %1380 = vmatpush.xpose.msra.mxu0 0.0
    %1381 = vmatpush.xpose.msra.mxu0 0.0
    %1382 = vmatpush.xpose.msra.mxu0 0.0
    %1383 = vmatpush.xpose.msra.mxu0 0.0
    %1384 = vmatpush.xpose.msra.mxu0 0.0
    %1385 = vmatpush.xpose.msra.mxu0 0.0
    %1386 = vmatpush.xpose.msra.mxu0 0.0
    %1387 = vmatpush.xpose.msra.mxu0 0.0
    %1388 = vmatpush.xpose.msra.mxu0 0.0
    %1389 = vmatpush.xpose.msra.mxu0 0.0
    %1390 = vmatpush.xpose.msra.mxu0 0.0
    %1391 = vmatpush.xpose.msra.mxu0 0.0
    %1392 = vmatpush.xpose.msra.mxu0 0.0
    %1393 = vmatpush.xpose.msra.mxu0 0.0
    %1394 = vmatpush.xpose.msra.mxu0 %v1377
    %1395 = vmatmul.f32.gmra.mxu0 %v1375
    %v1396 = vpop.f32.mrf.mxu0
    %v1397 = vadd.f32 0.0, %v1396
    %1398 = vdwg.mxu0
    %v1399 = vmul.f32 %v1397, 0.35355338
    %v1400 = vadd.f32 %v1399, %v529
    %v1401 = vsel %vm136, %v1400, -inf
    %1402 = vmax.xlane.f32.xlu0 %v1401
    %v1403 = vpop.xlane.xlu0 %1402
    %v1404 = vsub.f32 %v1400, %v1403
    %v1405 = vmul.f32 %v1404, 1.442695
    %v1406 = vpow.pop %v1405
    %v1407 = vsel %vm136, %v1406, 0.0
    %1408 = vadd.xlane.f32.xlu0 %v1407
    %v1409 = vpop.xlane.xlu0 %1408
    %v1410 = vrcp.pop %v1409
    %v1411 = vmul.f32 %v1406, %v1410
    %1412 = vrot.lane.b32.xlu0 %v1019, 56
    %v1413 = vpop.permute.xlu0 %1412
    %v1416 = vsel %vm136, %v1411, 0
    %1418 = vmatpush.msra.mxu0 0.0
    %1419 = vmatpush.msra.mxu0 0.0
    %1420 = vmatpush.msra.mxu0 0.0
    %1421 = vmatpush.msra.mxu0 0.0
    %1422 = vmatpush.msra.mxu0 0.0
    %1423 = vmatpush.msra.mxu0 0.0
    %1424 = vmatpush.msra.mxu0 0.0
    %1425 = vmatpush.msra.mxu0 0.0
    %1426 = vmatpush.msra.mxu0 0.0
    %1427 = vmatpush.msra.mxu0 0.0
    %1428 = vmatpush.msra.mxu0 0.0
    %1429 = vmatpush.msra.mxu0 0.0
    %1430 = vmatpush.msra.mxu0 0.0
    %1431 = vmatpush.msra.mxu0 0.0
    %1432 = vmatpush.msra.mxu0 0.0
    %1433 = vmatpush.msra.mxu0 %v1413
    %1434 = vmatmul.f32.gmra.mxu0 %v1416
    %v1435 = vpop.f32.mrf.mxu0
    %v1436 = vadd.f32 0.0, %v1435
    %1437 = vdwg.mxu0
    %1439 = vrot.lane.b32.xlu0 %v1436, 8
    %v1440 = vpop.permute.xlu0 %1439
    %1442 = vst.msk [vmem:[#allocation2 + $0x8] sm:$0xff] %vm278, %v1440
    %1443 = vrot.lane.b32.xlu0 %v1019, 112
    %v1444 = vpop.permute.xlu0 %1443
    %1445 = vrot.lane.b32.xlu0 %v1019, 80
    %v1446 = vpop.permute.xlu0 %1445
    %v1447 = vsel %vm136, %v1444, 0
    %v1449 = vsel %vm136, %v1446, 0
    %1451 = vmatpush.xpose.msra.mxu0 0.0
    %1452 = vmatpush.xpose.msra.mxu0 0.0
    %1453 = vmatpush.xpose.msra.mxu0 0.0
    %1454 = vmatpush.xpose.msra.mxu0 0.0
    %1455 = vmatpush.xpose.msra.mxu0 0.0
    %1456 = vmatpush.xpose.msra.mxu0 0.0
    %1457 = vmatpush.xpose.msra.mxu0 0.0
    %1458 = vmatpush.xpose.msra.mxu0 0.0
    %1459 = vmatpush.xpose.msra.mxu0 0.0
    %1460 = vmatpush.xpose.msra.mxu0 0.0
    %1461 = vmatpush.xpose.msra.mxu0 0.0
    %1462 = vmatpush.xpose.msra.mxu0 0.0
    %1463 = vmatpush.xpose.msra.mxu0 0.0
    %1464 = vmatpush.xpose.msra.mxu0 0.0
    %1465 = vmatpush.xpose.msra.mxu0 0.0
    %1466 = vmatpush.xpose.msra.mxu0 %v1449
    %1467 = vmatmul.f32.gmra.mxu0 %v1447
    %v1468 = vpop.f32.mrf.mxu0
    %v1469 = vadd.f32 0.0, %v1468
    %1470 = vdwg.mxu0
    %v1471 = vmul.f32 %v1469, 0.35355338
    %v1472 = vadd.f32 %v1471, %v602
    %v1473 = vsel %vm136, %v1472, -inf
    %1474 = vmax.xlane.f32.xlu0 %v1473
    %v1475 = vpop.xlane.xlu0 %1474
    %v1476 = vsub.f32 %v1472, %v1475
    %v1477 = vmul.f32 %v1476, 1.442695
    %v1478 = vpow.pop %v1477
    %v1479 = vsel %vm136, %v1478, 0.0
    %1480 = vadd.xlane.f32.xlu0 %v1479
    %v1481 = vpop.xlane.xlu0 %1480
    %v1482 = vrcp.pop %v1481
    %v1483 = vmul.f32 %v1478, %v1482
    %1484 = vrot.lane.b32.xlu0 %v1019, 48
    %v1485 = vpop.permute.xlu0 %1484
    %v1488 = vsel %vm136, %v1483, 0
    %1490 = vmatpush.msra.mxu0 0.0
    %1491 = vmatpush.msra.mxu0 0.0
    %1492 = vmatpush.msra.mxu0 0.0
    %1493 = vmatpush.msra.mxu0 0.0
    %1494 = vmatpush.msra.mxu0 0.0
    %1495 = vmatpush.msra.mxu0 0.0
    %1496 = vmatpush.msra.mxu0 0.0
    %1497 = vmatpush.msra.mxu0 0.0
    %1498 = vmatpush.msra.mxu0 0.0
    %1499 = vmatpush.msra.mxu0 0.0
    %1500 = vmatpush.msra.mxu0 0.0
    %1501 = vmatpush.msra.mxu0 0.0
    %1502 = vmatpush.msra.mxu0 0.0
    %1503 = vmatpush.msra.mxu0 0.0
    %1504 = vmatpush.msra.mxu0 0.0
    %1505 = vmatpush.msra.mxu0 %v1485
    %1506 = vmatmul.f32.gmra.mxu0 %v1488
    %v1507 = vpop.f32.mrf.mxu0
    %v1508 = vadd.f32 0.0, %v1507
    %1509 = vdwg.mxu0
    %1511 = vrot.lane.b32.xlu0 %v1508, 16
    %v1512 = vpop.permute.xlu0 %1511
    %1514 = vst.msk [vmem:[#allocation2 + $0x8] sm:$0xff] %vm354, %v1512
    %1515 = vrot.lane.b32.xlu0 %v1019, 104
    %v1516 = vpop.permute.xlu0 %1515
    %1517 = vrot.lane.b32.xlu0 %v1019, 72
    %v1518 = vpop.permute.xlu0 %1517
    %v1519 = vsel %vm136, %v1516, 0
    %v1521 = vsel %vm136, %v1518, 0
    %1523 = vmatpush.xpose.msra.mxu0 0.0
    %1524 = vmatpush.xpose.msra.mxu0 0.0
    %1525 = vmatpush.xpose.msra.mxu0 0.0
    %1526 = vmatpush.xpose.msra.mxu0 0.0
    %1527 = vmatpush.xpose.msra.mxu0 0.0
    %1528 = vmatpush.xpose.msra.mxu0 0.0
    %1529 = vmatpush.xpose.msra.mxu0 0.0
    %1530 = vmatpush.xpose.msra.mxu0 0.0
    %1531 = vmatpush.xpose.msra.mxu0 0.0
    %1532 = vmatpush.xpose.msra.mxu0 0.0
    %1533 = vmatpush.xpose.msra.mxu0 0.0
    %1534 = vmatpush.xpose.msra.mxu0 0.0
    %1535 = vmatpush.xpose.msra.mxu0 0.0
    %1536 = vmatpush.xpose.msra.mxu0 0.0
    %1537 = vmatpush.xpose.msra.mxu0 0.0
    %1538 = vmatpush.xpose.msra.mxu0 %v1521
    %1539 = vmatmul.f32.gmra.mxu0 %v1519
    %v1540 = vpop.f32.mrf.mxu0
    %v1541 = vadd.f32 0.0, %v1540
    %1542 = vdwg.mxu0
    %v1543 = vmul.f32 %v1541, 0.35355338
    %v1544 = vadd.f32 %v1543, %v675
    %v1545 = vsel %vm136, %v1544, -inf
    %1546 = vmax.xlane.f32.xlu0 %v1545
    %v1547 = vpop.xlane.xlu0 %1546
    %v1548 = vsub.f32 %v1544, %v1547
    %v1549 = vmul.f32 %v1548, 1.442695
    %v1550 = vpow.pop %v1549
    %v1551 = vsel %vm136, %v1550, 0.0
    %1552 = vadd.xlane.f32.xlu0 %v1551
    %v1553 = vpop.xlane.xlu0 %1552
    %v1554 = vrcp.pop %v1553
    %v1555 = vmul.f32 %v1550, %v1554
    %1556 = vrot.lane.b32.xlu0 %v1019, 40
    %v1557 = vpop.permute.xlu0 %1556
    %v1560 = vsel %vm136, %v1555, 0
    %1562 = vmatpush.msra.mxu0 0.0
    %1563 = vmatpush.msra.mxu0 0.0
    %1564 = vmatpush.msra.mxu0 0.0
    %1565 = vmatpush.msra.mxu0 0.0
    %1566 = vmatpush.msra.mxu0 0.0
    %1567 = vmatpush.msra.mxu0 0.0
    %1568 = vmatpush.msra.mxu0 0.0
    %1569 = vmatpush.msra.mxu0 0.0
    %1570 = vmatpush.msra.mxu0 0.0
    %1571 = vmatpush.msra.mxu0 0.0
    %1572 = vmatpush.msra.mxu0 0.0
    %1573 = vmatpush.msra.mxu0 0.0
    %1574 = vmatpush.msra.mxu0 0.0
    %1575 = vmatpush.msra.mxu0 0.0
    %1576 = vmatpush.msra.mxu0 0.0
    %1577 = vmatpush.msra.mxu0 %v1557
    %1578 = vmatmul.f32.gmra.mxu0 %v1560
    %v1579 = vpop.f32.mrf.mxu0
    %v1580 = vadd.f32 0.0, %v1579
    %1581 = vdwg.mxu0
    %1583 = vrot.lane.b32.xlu0 %v1580, 24
    %v1584 = vpop.permute.xlu0 %1583
    %1586 = vst.msk [vmem:[#allocation2 + $0x8] sm:$0xff] %vm430, %v1584
    %v1587 = vld [vmem:[#allocation2] sm:$0xff]
    %v1588 = vld [vmem:[#allocation2 + $0x8] sm:$0xff]
    %v1589 = vpack.c.bf16 %v1588, %v1587
    %s1590 = scalar_lea.vmem %s4, 16
    %v1591 = vld [vmem:[%s1590] sm:$0xf]
    %v1592 = vld [vmem:[%s1590 + $0x4] sm:$0xf]
    %v1593 = vld [vmem:[%s1590 + $0x8] sm:$0xf]
    %v1594 = vld [vmem:[%s1590 + $0xc] sm:$0xf]
    %v1595 = vld [vmem:[%s7 + $0xb] sm:$0x1]
    %v1596 = vperm.slane %v1595, 0
    %v1601 = vunpack.c.l.b16 %v1591
    %v1602 = vunpack.c.l.b16 %v1592
    %v1603 = vunpack.c.l.b16 %v1593
    %v1604 = vunpack.c.l.b16 %v1594
    %v1605 = vpack.c.b16 %v1602, %v1601
    %v1606 = vpack.c.b16 %v1604, %v1603
    %v1610 = vsel %vm35, %v1589, 0
    %1612 = vmatpush.bf16.msra.mxu0 0
    %1613 = vmatpush.bf16.msra.mxu0 0
    %1614 = vmatpush.bf16.msra.mxu0 0
    %1615 = vmatpush.bf16.msra.mxu0 0
    %1616 = vmatpush.bf16.msra.mxu0 0
    %1617 = vmatpush.bf16.msra.mxu0 0
    %1618 = vmatpush.bf16.msra.mxu0 %v1606
    %1619 = vmatpush.bf16.msra.mxu0 %v1605
    %1620 = vmatmul.bf16.gmra.mxu0 %v1610
    %v1621 = vpop.f32.mrf.mxu0
    %v1622 = vadd.f32 %v1596, %v1621
    %v1623 = vpop.f32.mrf.mxu0
    %v1624 = vadd.f32 %v1596, %v1623
    %1625 = vdwg.mxu0
    %v1626 = vadd.f32 %v982, %v1622
    %v1627 = vadd.f32 %v983, %v1624
    %v1628 = vld [vmem:[%s7 + $0xc] sm:$0x1]
    %v1629 = vld [vmem:[%s7 + $0xd] sm:$0x1]
    %v1630 = vsel %vm35, %v1626, 0.0
    %1631 = vadd.xlane.f32.xlu0 %v1630
    %v1632 = vpop.xlane.xlu0 %1631
    %v1633 = vsel %vm35, %v1627, 0.0
    %1634 = vadd.xlane.f32.xlu0 %v1633
    %v1635 = vpop.xlane.xlu0 %1634
    %v1636 = vmul.f32 %v1632, %v48
    %v1637 = vmul.f32 %v1635, %v48
    %v1638 = vsub.f32 %v1626, %v1636
    %v1639 = vsub.f32 %v1627, %v1637
    %v1640 = vmul.f32 %v1638, %v1638
    %v1641 = vmul.f32 %v1639, %v1639
    %v1642 = vsel %vm35, %v1640, 0.0
    %1643 = vadd.xlane.f32.xlu0 %v1642
    %v1644 = vpop.xlane.xlu0 %1643
    %v1645 = vsel %vm35, %v1641, 0.0
    %1646 = vadd.xlane.f32.xlu0 %v1645
    %v1647 = vpop.xlane.xlu0 %1646
    %v1648 = vmul.f32 %v1644, %v48
    %v1649 = vmul.f32 %v1647, %v48
    %v1650 = vadd.f32 %v1648, 1e-05
    %v1651 = vadd.f32 %v1649, 1e-05
    %v1652 = vrsqrt.pop %v1650
    %v1653 = vmul.f32 %v1652, %v1650
    %v1654 = vmul.f32 %v1653, %v1652
    %v1655 = vmul.f32 0.5, %v1654
    %v1656 = vsub.f32 1.5, %v1655
    %v1657 = vmul.f32 %v1652, %v1656
    %vm1658 = vweird.f32 %v1650
    %vm1659 = vweird.f32 %v1652
    %vm1660 = vmor %vm1658, %vm1659
    %v1661 = vsel %vm1660, %v1652, %v1657
    %v1662 = vrsqrt.pop %v1651
    %v1663 = vmul.f32 %v1662, %v1651
    %v1664 = vmul.f32 %v1663, %v1662
    %v1665 = vmul.f32 0.5, %v1664
    %v1666 = vsub.f32 1.5, %v1665
    %v1667 = vmul.f32 %v1662, %v1666
    %vm1668 = vweird.f32 %v1651
    %vm1669 = vweird.f32 %v1662
    %vm1670 = vmor %vm1668, %vm1669
    %v1671 = vsel %vm1670, %v1662, %v1667
    %v1672 = vmul.f32 %v1638, %v1661
    %v1673 = vmul.f32 %v1639, %v1671
    %v1674 = vperm.slane %v1628, 0
    %v1675 = vmul.f32 %v1672, %v1674
    %v1676 = vmul.f32 %v1673, %v1674
    %v1677 = vperm.slane %v1629, 0
    %v1678 = vadd.f32 %v1675, %v1677
    %v1679 = vadd.f32 %v1676, %v1677
    %v1680 = vpack.c.bf16 %v1679, %v1678
    %s1681 = scalar_lea.vmem %s5, 16
    %v1682 = vld [vmem:[%s1681] sm:$0xf]
    %v1683 = vld [vmem:[%s1681 + $0x4] sm:$0xf]
    %v1684 = vld [vmem:[%s1681 + $0x8] sm:$0xf]
    %v1685 = vld [vmem:[%s1681 + $0xc] sm:$0xf]
    %v1686 = vld [vmem:[%s7 + $0x10] sm:$0x1]
    %v1687 = vperm.slane %v1686, 0
    %v1692 = vunpack.c.l.b16 %v1682
    %v1693 = vunpack.c.l.b16 %v1683
    %v1694 = vunpack.c.l.b16 %v1684
    %v1695 = vunpack.c.l.b16 %v1685
    %v1696 = vpack.c.b16 %v1693, %v1692
    %v1697 = vpack.c.b16 %v1695, %v1694
    %v1701 = vsel %vm35, %v1680, 0
    %1703 = vmatpush.bf16.msra.mxu0 0
    %1704 = vmatpush.bf16.msra.mxu0 0
    %1705 = vmatpush.bf16.msra.mxu0 0
    %1706 = vmatpush.bf16.msra.mxu0 0
    %1707 = vmatpush.bf16.msra.mxu0 0
    %1708 = vmatpush.bf16.msra.mxu0 0
    %1709 = vmatpush.bf16.msra.mxu0 %v1697
    %1710 = vmatpush.bf16.msra.mxu0 %v1696
    %1711 = vmatmul.bf16.gmra.mxu0 %v1701
    %v1712 = vpop.f32.mrf.mxu0
    %v1713 = vadd.f32 %v1687, %v1712
    %v1714 = vpop.f32.mrf.mxu0
    %v1715 = vadd.f32 %v1687, %v1714
    %1716 = vdwg.mxu0
    %v1717 = vmax.f32 %v1713, 0.0
    %v1718 = vmax.f32 %v1715, 0.0
    %v1719 = vpack.c.bf16 %v1718, %v1717
    %s1720 = scalar_lea.vmem %s6, 64
    %v1721 = vld [vmem:[%s1720] sm:$0xf]
    %v1722 = vld [vmem:[%s1720 + $0x4] sm:$0xf]
    %v1723 = vld [vmem:[%s1720 + $0x8] sm:$0xf]
    %v1724 = vld [vmem:[%s1720 + $0xc] sm:$0xf]
    %v1725 = vld [vmem:[%s1720 + $0x10] sm:$0xf]
    %v1726 = vld [vmem:[%s1720 + $0x14] sm:$0xf]
    %v1727 = vld [vmem:[%s1720 + $0x18] sm:$0xf]
    %v1728 = vld [vmem:[%s1720 + $0x1c] sm:$0xf]
    %v1729 = vld [vmem:[%s1720 + $0x20] sm:$0xf]
    %v1730 = vld [vmem:[%s1720 + $0x24] sm:$0xf]
    %v1731 = vld [vmem:[%s1720 + $0x28] sm:$0xf]
    %v1732 = vld [vmem:[%s1720 + $0x2c] sm:$0xf]
    %v1733 = vld [vmem:[%s1720 + $0x30] sm:$0xf]
    %v1734 = vld [vmem:[%s1720 + $0x34] sm:$0xf]
    %v1735 = vld [vmem:[%s1720 + $0x38] sm:$0xf]
    %v1736 = vld [vmem:[%s1720 + $0x3c] sm:$0xf]
    %v1737 = vld [vmem:[%s7 + $0x11] sm:$0x1]
    %v1738 = vperm.slane %v1737, 0
    %v1755 = vunpack.c.l.b16 %v1721
    %v1756 = vunpack.c.l.b16 %v1722
    %v1757 = vunpack.c.l.b16 %v1723
    %v1758 = vunpack.c.l.b16 %v1724
    %v1759 = vunpack.c.l.b16 %v1725
    %v1760 = vunpack.c.l.b16 %v1726
    %v1761 = vunpack.c.l.b16 %v1727
    %v1762 = vunpack.c.l.b16 %v1728
    %v1763 = vunpack.c.l.b16 %v1729
    %v1764 = vunpack.c.l.b16 %v1730
    %v1765 = vunpack.c.l.b16 %v1731
    %v1766 = vunpack.c.l.b16 %v1732
    %v1767 = vunpack.c.l.b16 %v1733
    %v1768 = vunpack.c.l.b16 %v1734
    %v1769 = vunpack.c.l.b16 %v1735
    %v1770 = vunpack.c.l.b16 %v1736
    %v1771 = vpack.c.b16 %v1756, %v1755
    %v1772 = vpack.c.b16 %v1758, %v1757
    %v1773 = vpack.c.b16 %v1760, %v1759
    %v1774 = vpack.c.b16 %v1762, %v1761
    %v1775 = vpack.c.b16 %v1764, %v1763
    %v1776 = vpack.c.b16 %v1766, %v1765
    %v1777 = vpack.c.b16 %v1768, %v1767
    %v1778 = vpack.c.b16 %v1770, %v1769
    %1787 = vmatpush.bf16.msra.mxu0 %v1778
    %1788 = vmatpush.bf16.msra.mxu0 %v1777
    %1789 = vmatpush.bf16.msra.mxu0 %v1776
    %1790 = vmatpush.bf16.msra.mxu0 %v1775
    %1791 = vmatpush.bf16.msra.mxu0 %v1774
    %1792 = vmatpush.bf16.msra.mxu0 %v1773
    %1793 = vmatpush.bf16.msra.mxu0 %v1772
    %1794 = vmatpush.bf16.msra.mxu0 %v1771
    %1795 = vmatmul.bf16.gmra.mxu0 %v1719
    %v1796 = vpop.f32.mrf.mxu0
    %v1797 = vadd.f32 %v1738, %v1796
    %v1798 = vpop.f32.mrf.mxu0
    %v1799 = vadd.f32 %v1738, %v1798
    %1800 = vdwg.mxu0
    %v1801 = vadd.f32 %v1678, %v1797
    %v1802 = vadd.f32 %v1679, %v1799
    %v1803 = vld [vmem:[%s7 + $0xe] sm:$0x1]
    %v1804 = vld [vmem:[%s7 + $0xf] sm:$0x1]
    %v1805 = vsel %vm35, %v1801, 0.0
    %1806 = vadd.xlane.f32.xlu0 %v1805
    %v1807 = vpop.xlane.xlu0 %1806
    %v1808 = vsel %vm35, %v1802, 0.0
    %1809 = vadd.xlane.f32.xlu0 %v1808
    %v1810 = vpop.xlane.xlu0 %1809
    %v1811 = vmul.f32 %v1807, %v48
    %v1812 = vmul.f32 %v1810, %v48
    %v1813 = vsub.f32 %v1801, %v1811
    %v1814 = vsub.f32 %v1802, %v1812
    %v1815 = vmul.f32 %v1813, %v1813
    %v1816 = vmul.f32 %v1814, %v1814
    %v1817 = vsel %vm35, %v1815, 0.0
    %1818 = vadd.xlane.f32.xlu0 %v1817
    %v1819 = vpop.xlane.xlu0 %1818
    %v1820 = vsel %vm35, %v1816, 0.0
    %1821 = vadd.xlane.f32.xlu0 %v1820
    %v1822 = vpop.xlane.xlu0 %1821
    %v1823 = vmul.f32 %v1819, %v48
    %v1824 = vmul.f32 %v1822, %v48
    %v1825 = vadd.f32 %v1823, 1e-05
    %v1826 = vadd.f32 %v1824, 1e-05
    %v1827 = vrsqrt.pop %v1825
    %v1828 = vmul.f32 %v1827, %v1825
    %v1829 = vmul.f32 %v1828, %v1827
    %v1830 = vmul.f32 0.5, %v1829
    %v1831 = vsub.f32 1.5, %v1830
    %v1832 = vmul.f32 %v1827, %v1831
    %vm1833 = vweird.f32 %v1825
    %vm1834 = vweird.f32 %v1827
    %vm1835 = vmor %vm1833, %vm1834
    %v1836 = vsel %vm1835, %v1827, %v1832
    %v1837 = vrsqrt.pop %v1826
    %v1838 = vmul.f32 %v1837, %v1826
    %v1839 = vmul.f32 %v1838, %v1837
    %v1840 = vmul.f32 0.5, %v1839
    %v1841 = vsub.f32 1.5, %v1840
    %v1842 = vmul.f32 %v1837, %v1841
    %vm1843 = vweird.f32 %v1826
    %vm1844 = vweird.f32 %v1837
    %vm1845 = vmor %vm1843, %vm1844
    %v1846 = vsel %vm1845, %v1837, %v1842
    %v1847 = vmul.f32 %v1813, %v1836
    %v1848 = vmul.f32 %v1814, %v1846
    %v1849 = vperm.slane %v1803, 0
    %v1850 = vmul.f32 %v1847, %v1849
    %v1851 = vmul.f32 %v1848, %v1849
    %v1852 = vperm.slane %v1804, 0
    %v1853 = vadd.f32 %v1850, %v1852
    %v1854 = vadd.f32 %v1851, %v1852
    %1855 = vst.msk [vmem:[#allocation3] sm:$0xff] %vm35, %v1853
    %1856 = vst.msk [vmem:[#allocation3 + $0x8] sm:$0xff] %vm35, %v1854
    // Predicated region
    $region34: #{tpu_custom_call.1} parent=1 // pred_check
      _
    $region35: #{tpu_custom_call.1} parent=1 // pred_check_branch
      %1858 = sbr.rel (0) target = $region37
    $region36: #{tpu_custom_call.1} parent=1 // pred_region
      %1860 = vsyncadd [#allocation4], 0
      %s1861 = sshll.u32 [#allocation3], 4
      %s1862 = int_to_ptr.vmem [resolvable:$true] %s1861
      %s1863 = sshll.u32 %s8, 4
      %s1864 = int_to_ptr.hbm [resolvable:$true] %s1863
      %1869 = dma.vmem_to_hbm [thread:$0]  %s1862, 256, %s1864, [#allocation4], 128, 128, 8
    $region37: #{tpu_custom_call.1} parent=1 // pred_fallthru
      _
    // Predicated region
    $region38: #{tpu_custom_call.1} parent=1 // pred_check
      _
    $region39: #{tpu_custom_call.1} parent=1 // pred_check_branch
      %1871 = sbr.rel (0) target = $region41
    $region40: #{tpu_custom_call.1} parent=1 // pred_region
      %1873 = dma.done [#allocation4], 256
    $region41: #{tpu_custom_call.1} parent=1 // pred_fallthru
      _
    %1874 = vsyncpa [#allocation4], 1

</llo_original>
